<compile_context>
chip_gen: v5e
topology: v5e:2x2
jax: 0.10.0
libtpu: 0.0.40
codegen_flags: <defaults>
</compile_context>

<pallas_src>
import functools
import numpy as np
import jax
import jax.numpy as jnp
from jax.experimental import pallas as pl
from jax.experimental.pallas import tpu as pltpu

DEFAULT_ANCHORS = [[10, 13, 16, 30, 33, 23],
                   [30, 61, 62, 45, 59, 119],
                   [116, 90, 156, 198, 373, 326]]


def _round_up(v, m):
    return (v + m - 1) // m * m


def _pick_tm(m_max):
    # Largest row tile that keeps >= 2 tiles on the biggest level; blocks are
    # tiny vs. VMEM (x: TM*Cmax*2B, outs: 2*TM*128*4B, double-buffered).
    for tm in (1024, 512, 256):
        if m_max >= 2 * tm:
            return tm
    return max(16, _round_up(min(m_max, 256), 16))


def _yolo_head_kernel(lvl_ref, row0_ref, nynx_ref, nx_ref,   # SMEM prefetch
                      x_ref, w_ref, cp_ref,                  # inputs
                      raw_ref, dec_ref,                      # outputs
                      *, tm, npad):
    """One row-tile of the fused YOLO head.

    x_ref  : (TM, Cmax)      bf16 feature rows (zero-padded channels)
    w_ref  : (1, Cmax, NPAD) bf16 conv weight for this tile's level
    cp_ref : (1, 8, NPAD)    f32 per-column params for this tile's level:
             row0 bias | row1 sel_x | row2 sel_y | row3 rest-mask
             row4 m_xy*stride | row5 m_wh*anchor_grid | rows 6-7 unused
    raw_ref: (TM, NPAD)      f32 conv logits (pre-sigmoid)   -> x[i]
    dec_ref: (TM, NPAD)      f32 decoded predictions         -> z[i]
    """
    del lvl_ref  # only used by the index_maps
    t = pl.program_id(0)

    cp = cp_ref[0]                                        # (8, NPAD)

    # ---- 1x1 conv == channel matmul on the MXU (bf16 in, f32 accumulate) ----
    z = jnp.dot(x_ref[...], w_ref[0], preferred_element_type=jnp.float32)
    z = z + cp[0:1, :]                                    # bias
    raw_ref[...] = z

    s = jax.nn.sigmoid(z)

    sel_x = cp[1:2, :]        # 1 on the x-offset column of each anchor
    sel_y = cp[2:3, :]        # 1 on the y-offset column of each anchor
    rest = cp[3:4, :]         # 1 on objectness / class columns
    xys = cp[4:5, :]          # stride on xy columns, 0 elsewhere
    anchor = cp[5:6, :]       # anchor_grid value on wh columns, 0 elsewhere

    # ---- per-row grid offsets generated in-kernel (VPU filler under MXU) ----
    ii = jax.lax.broadcasted_iota(jnp.int32, (tm, npad), 0)
    rows = (ii + row0_ref[t]).astype(jnp.float32)         # level-local row ids
    nynx = jnp.full((1, 1), nynx_ref[t], jnp.int32).astype(jnp.float32)
    nxf = jnp.full((1, 1), nx_ref[t], jnp.int32).astype(jnp.float32)
    # exact integer div/mod via the (r + 0.5)/d floor trick (values << 2^22)
    rem = rows - jnp.floor((rows + 0.5) / nynx) * nynx    # = y*nx + x
    gy = jnp.floor((rem + 0.5) / nxf)
    gx = rem - gy * nxf
    grid_term = (gx - 0.5) * sel_x + (gy - 0.5) * sel_y

    # ---- YOLO decode --------------------------------------------------------
    # dec = sigmoid            on conf/class columns
    #     = (2*sig + grid)*stride       on xy columns
    #     = (2*sig)^2 * anchor_grid     on wh columns
    s2 = s * 2.0
    dec_ref[...] = s * rest + (s2 + grid_term) * xys + (s2 * s2) * anchor


def _run_fused(lvl_tbl, row0_tbl, nynx_tbl, nx_tbl, x_all, w_all, cp_all,
               *, tm, npad, n_tiles):
    m_total, cmax = x_all.shape
    kern = functools.partial(_yolo_head_kernel, tm=tm, npad=npad)
    raw, dec = pl.pallas_call(
        kern,
        out_shape=(jax.ShapeDtypeStruct((m_total, npad), jnp.float32),
                   jax.ShapeDtypeStruct((m_total, npad), jnp.float32)),
        grid_spec=pltpu.PrefetchScalarGridSpec(
            num_scalar_prefetch=4,
            grid=(n_tiles,),
            in_specs=[
                # feature rows: one tile per grid step
                pl.BlockSpec((tm, cmax), lambda t, lvl, r0, sp, nx: (t, 0)),
                # per-level weight / params (re-DMA only when level changes)
                pl.BlockSpec((1, cmax, npad),
                             lambda t, lvl, r0, sp, nx: (lvl[t], 0, 0)),
                pl.BlockSpec((1, 8, npad),
                             lambda t, lvl, r0, sp, nx: (lvl[t], 0, 0)),
            ],
            out_specs=(
                pl.BlockSpec((tm, npad), lambda t, lvl, r0, sp, nx: (t, 0)),
                pl.BlockSpec((tm, npad), lambda t, lvl, r0, sp, nx: (t, 0)),
            ),
        ),
        compiler_params=pltpu.CompilerParams(
            dimension_semantics=("parallel",),
            # safe on v5e/v6e (128 MiB) and v7x (64 MiB); actual use is < 8 MiB.
            vmem_limit_bytes=32 * 1024 * 1024,
        ),
    )(lvl_tbl, row0_tbl, nynx_tbl, nx_tbl, x_all, w_all, cp_all)
    return raw, dec


class YOLOHeadPallas:
    def __init__(self, nc, anchors=None, ch=(256, 512, 1024),
                 stride=(8.0, 16.0, 32.0), seed=0):
        anchors = DEFAULT_ANCHORS if anchors is None else anchors
        self.nc = nc
        self.no = nc + 5
        self.nl = len(anchors)
        self.na = len(anchors[0]) // 2
        self.ch = tuple(ch)
        self.stride = np.asarray(stride, dtype=np.float32)

        a = np.asarray(anchors, dtype=np.float32).reshape(self.nl, -1, 2)
        a = a / self.stride.reshape(-1, 1, 1)
        # check_anchor_order
        pm = a.prod(-1).mean(-1)
        da = pm[-1] - pm[0]
        ds = self.stride[-1] - self.stride[0]
        if da != 0 and np.sign(da) != np.sign(ds):
            a = a[::-1].copy()
        self.anchors = a

        # deterministic synthetic conv params (nn.Conv2d(c, na*no, 1) per level)
        self.N = self.na * self.no
        self.NPAD = _round_up(self.N, 128)            # lane-dense output width
        self.cmax = _round_up(max(self.ch), 128)      # lane-dense input width
        key = jax.random.PRNGKey(seed)
        self.W, self.b = [], []
        for c in self.ch:
            key, k1, k2 = jax.random.split(key, 3)
            self.W.append(jax.random.normal(k1, (self.N, c), jnp.float32) / np.sqrt(c))
            self.b.append(jax.random.normal(k2, (self.N,), jnp.float32) * 0.01)

        # ---- packed kernel-side parameters (built once) ----------------------
        o = np.arange(self.N) % self.no
        a_idx = np.arange(self.N) // self.no
        w_all = np.zeros((self.nl, self.cmax, self.NPAD), np.float32)
        cp_all = np.zeros((self.nl, 8, self.NPAD), np.float32)
        for i, c in enumerate(self.ch):
            w_all[i, :c, :self.N] = np.asarray(self.W[i]).T
            cp_all[i, 0, :self.N] = np.asarray(self.b[i])
            cp_all[i, 1, :self.N] = (o == 0)
            cp_all[i, 2, :self.N] = (o == 1)
            cp_all[i, 3, :self.N] = (o >= 4)
            cp_all[i, 4, :self.N] = (o < 2) * self.stride[i]
            anchor_row = np.zeros(self.N, np.float32)
            wh = (o >= 2) & (o < 4)
            anchor_grid = self.anchors[i] * self.stride[i]      # (na, 2), pixels
            anchor_row[wh] = anchor_grid[a_idx[wh], o[wh] - 2]
            cp_all[i, 5, :self.N] = anchor_row
        self.W_all = jnp.asarray(w_all, jnp.bfloat16)
        self.cp_all = jnp.asarray(cp_all, jnp.float32)
        self._plan_cache = {}

    # per-shape-signature tiling plan + SMEM prefetch tables (cached)
    def _plan(self, shapes):
        key = tuple(shapes)
        if key in self._plan_cache:
            return self._plan_cache[key]
        m_levels = [bs * ny * nx for (bs, c, ny, nx) in shapes]
        tm = _pick_tm(max(m_levels))
        lvl, row0, nynx, nxs = [], [], [], []
        m_pad, row_off = [], []
        off = 0
        for i, (bs, c, ny, nx) in enumerate(shapes):
            m = bs * ny * nx
            n_t = -(-m // tm)
            mp = n_t * tm
            m_pad.append(mp)
            row_off.append(off)
            off += mp
            for tt in range(n_t):
                lvl.append(i)
                row0.append(tt * tm)
                nynx.append(ny * nx)
                nxs.append(nx)
        plan = dict(
            tm=tm, m_pad=m_pad, row_off=row_off, n_tiles=len(lvl),
            lvl=jnp.asarray(lvl, jnp.int32),
            row0=jnp.asarray(row0, jnp.int32),
            nynx=jnp.asarray(nynx, jnp.int32),
            nx=jnp.asarray(nxs, jnp.int32),
        )
        self._plan_cache[key] = plan
        return plan

    def __call__(self, xs):
        # xs: list of NCHW float32 arrays, one per detection level
        shapes = tuple(x.shape for x in xs)
        plan = self._plan(shapes)
        tm = plan["tm"]

        # pack all levels into one lane-dense (M_total_pad, Cmax) bf16 row matrix
        parts = []
        for i, x in enumerate(xs):
            bs, c, ny, nx = x.shape
            m = bs * ny * nx
            rows = jnp.transpose(x, (0, 2, 3, 1)).reshape(m, c)
            rows = jnp.pad(rows, ((0, plan["m_pad"][i] - m), (0, self.cmax - c)))
            parts.append(rows)
        x_all = jnp.concatenate(parts, axis=0).astype(jnp.bfloat16)

        raw, dec = _run_fused(plan["lvl"], plan["row0"], plan["nynx"], plan["nx"],
                              x_all, self.W_all, self.cp_all,
                              tm=tm, npad=self.NPAD, n_tiles=plan["n_tiles"])

        # unpack per level, drop row/column padding
        z_list, x_out = [], []
        for i, x in enumerate(xs):
            bs, c, ny, nx = x.shape
            m = bs * ny * nx
            off = plan["row_off"][i]
            raw_i = raw[off:off + m, :self.N].reshape(bs, ny, nx, self.na, self.no)
            dec_i = dec[off:off + m, :self.N].reshape(bs, ny, nx, self.na, self.no)
            raw_i = jnp.transpose(raw_i, (0, 3, 1, 2, 4))   # (bs, na, ny, nx, no)
            dec_i = jnp.transpose(dec_i, (0, 3, 1, 2, 4))
            x_out.append(raw_i)
            z_list.append(dec_i.reshape(bs, -1, self.no))
        return jnp.concatenate(z_list, axis=1), x_out


def ref_forward(head, xs):
    """Pure-JAX f32 reference mirroring the PyTorch eval-mode forward."""
    z_list, x_out = [], []
    for i in range(head.nl):
        x = xs[i]
        bs, _, ny, nx = x.shape
        conv = jnp.einsum('bchw,oc->bohw', x, head.W[i]) + head.b[i][None, :, None, None]
        x5 = conv.reshape(bs, head.na, head.no, ny, nx).transpose(0, 1, 3, 4, 2)
        x_out.append(x5)
        y = jax.nn.sigmoid(x5)
        ys = jnp.arange(ny, dtype=jnp.float32)
        xr = jnp.arange(nx, dtype=jnp.float32)
        yv, xv = jnp.meshgrid(ys, xr, indexing='ij')
        grid = jnp.stack([xv, yv], -1)[None, None] - 0.5
        anchor_grid = jnp.asarray(
            (head.anchors[i] * head.stride[i]).reshape(1, head.na, 1, 1, 2))
        xy = (y[..., 0:2] * 2 + grid) * head.stride[i]
        wh = (y[..., 2:4] * 2) ** 2 * anchor_grid
        y = jnp.concatenate([xy, wh, y[..., 4:]], axis=-1)
        z_list.append(y.reshape(bs, -1, head.no))
    return jnp.concatenate(z_list, axis=1), x_out


if __name__ == "__main__":
    nc = 3
    ch = (32, 64, 128)
    bs = 2
    spatial = [(16, 16), (8, 8), (4, 4)]   # strides 8/16/32 of a 128x128 image

    head = YOLOHeadPallas(nc=nc, ch=ch)

    key = jax.random.PRNGKey(0)
    xs = []
    for c, (ny, nx) in zip(ch, spatial):
        key, k = jax.random.split(key)
        xs.append(jax.random.normal(k, (bs, c, ny, nx), jnp.float32))

    z, x_out = head(xs)
    jax.block_until_ready(z)
    for t in x_out:
        jax.block_until_ready(t)

    z_ref, x_ref = ref_forward(head, xs)
    # Kernel uses bf16 MXU inputs (f32 accumulate).  Decoded boxes are in pixel
    # units, so allow a small absolute slack there; raw logits stay tight.
    assert np.allclose(np.asarray(z), np.asarray(z_ref), rtol=2e-2, atol=1e-1)
    for a, b in zip(x_out, x_ref):
        assert np.allclose(np.asarray(a), np.asarray(b), rtol=2e-2, atol=2e-2)

    print("KERNEL_OK")
</pallas_src>

<mosaic_0001>
module attributes {stable_mosaic.version = 11 : i64} {
  func.func @_yolo_head_kernel(%arg0: i32, %arg1: memref<4xi32, #tpu.memory_space<smem>>, %arg2: memref<4xi32, #tpu.memory_space<smem>>, %arg3: memref<4xi32, #tpu.memory_space<smem>>, %arg4: memref<4xi32, #tpu.memory_space<smem>>, %arg5: memref<256x128xbf16, #tpu.memory_space<vmem>>, %arg6: memref<1x128x128xbf16, #tpu.memory_space<vmem>>, %arg7: memref<1x8x128xf32, #tpu.memory_space<vmem>>, %arg8: memref<256x128xf32, #tpu.memory_space<vmem>>, %arg9: memref<256x128xf32, #tpu.memory_space<vmem>>) attributes {dimension_semantics = [#tpu.dimension_semantics<parallel>], iteration_bounds = array<i64: 4>, scalar_prefetch = 4 : i64, scratch_operands = 0 : i64, tpu.core_type = #tpu.core_type<tc>, window_params = [{transform_indices = @transform_0, window_bounds = array<i64: 256, 128>}, {transform_indices = @transform_1, window_bounds = array<i64: 1, 128, 128>}, {transform_indices = @transform_2, window_bounds = array<i64: 1, 8, 128>}, {transform_indices = @transform_3, window_bounds = array<i64: 256, 128>}, {transform_indices = @transform_4, window_bounds = array<i64: 256, 128>}]} {
    %c0 = arith.constant 0 : index
    %c0_0 = arith.constant 0 : index
    %c0_1 = arith.constant 0 : index
    %0 = vector.load %arg7[%c0, %c0_0, %c0_1] : memref<1x8x128xf32, #tpu.memory_space<vmem>>, vector<1x8x128xf32>
    %1 = vector.shape_cast %0 : vector<1x8x128xf32> to vector<8x128xf32>
    %c0_2 = arith.constant 0 : index
    %c0_3 = arith.constant 0 : index
    %2 = vector.load %arg5[%c0_2, %c0_3] : memref<256x128xbf16, #tpu.memory_space<vmem>>, vector<256x128xbf16>
    %c0_4 = arith.constant 0 : index
    %c0_5 = arith.constant 0 : index
    %c0_6 = arith.constant 0 : index
    %3 = vector.load %arg6[%c0_4, %c0_5, %c0_6] : memref<1x128x128xbf16, #tpu.memory_space<vmem>>, vector<1x128x128xbf16>
    %4 = vector.shape_cast %3 : vector<1x128x128xbf16> to vector<128x128xbf16>
    %cst = arith.constant dense<0.000000e+00> : vector<256x128xf32>
    %5 = tpu.matmul %2, %4, %cst {dimension_numbers = #tpu.dot_dimension_numbers<[1], [0], [0], [1], [0, 0, 1, 1], [], []>} : vector<256x128xbf16>, vector<128x128xbf16>, vector<256x128xf32> -> vector<256x128xf32>
    %6 = vector.extract_strided_slice %1 {offsets = [0, 0], sizes = [1, 128], strides = [1, 1]} : vector<8x128xf32> to vector<1x128xf32>
    %7 = vector.broadcast %6 : vector<1x128xf32> to vector<256x128xf32>
    %8 = arith.addf %5, %7 : vector<256x128xf32>
    %c0_7 = arith.constant 0 : index
    %c0_8 = arith.constant 0 : index
    %9 = vector.load %arg8[%c0_7, %c0_8] : memref<256x128xf32, #tpu.memory_space<vmem>>, vector<256x128xf32>
    tpu.vector_store %arg8[%c0_7, %c0_8], %8 {strides = array<i32>} : memref<256x128xf32, #tpu.memory_space<vmem>>, vector<256x128xf32>,
    %10 = arith.negf %8 : vector<256x128xf32>
    %11 = math.exp %10 : vector<256x128xf32>
    %cst_9 = arith.constant 1.000000e+00 : f32
    %12 = vector.broadcast %cst_9 : f32 to vector<256x128xf32>
    %13 = arith.addf %12, %11 : vector<256x128xf32>
    %14 = arith.divf %12, %13 : vector<256x128xf32>
    %15 = vector.extract_strided_slice %1 {offsets = [1, 0], sizes = [1, 128], strides = [1, 1]} : vector<8x128xf32> to vector<1x128xf32>
    %16 = vector.extract_strided_slice %1 {offsets = [2, 0], sizes = [1, 128], strides = [1, 1]} : vector<8x128xf32> to vector<1x128xf32>
    %17 = vector.extract_strided_slice %1 {offsets = [3, 0], sizes = [1, 128], strides = [1, 1]} : vector<8x128xf32> to vector<1x128xf32>
    %18 = vector.extract_strided_slice %1 {offsets = [4, 0], sizes = [1, 128], strides = [1, 1]} : vector<8x128xf32> to vector<1x128xf32>
    %19 = vector.extract_strided_slice %1 {offsets = [5, 0], sizes = [1, 128], strides = [1, 1]} : vector<8x128xf32> to vector<1x128xf32>
    %20 = tpu.iota {dimensions = array<i32: 0>} : vector<256x128xi32>
    %21 = arith.index_cast %arg0 : i32 to index
    %22 = memref.load %arg2[%21] : memref<4xi32, #tpu.memory_space<smem>>
    %23 = vector.broadcast %22 : i32 to vector<256x128xi32>
    %24 = arith.addi %20, %23 : vector<256x128xi32>
    %25 = arith.sitofp %24 : vector<256x128xi32> to vector<256x128xf32>
    %26 = arith.index_cast %arg0 : i32 to index
    %27 = memref.load %arg3[%26] : memref<4xi32, #tpu.memory_space<smem>>
    %28 = vector.broadcast %27 : i32 to vector<1x1xi32>
    %29 = arith.sitofp %28 : vector<1x1xi32> to vector<1x1xf32>
    %30 = arith.index_cast %arg0 : i32 to index
    %31 = memref.load %arg4[%30] : memref<4xi32, #tpu.memory_space<smem>>
    %32 = vector.broadcast %31 : i32 to vector<1x1xi32>
    %33 = arith.sitofp %32 : vector<1x1xi32> to vector<1x1xf32>
    %cst_10 = arith.constant 5.000000e-01 : f32
    %34 = vector.broadcast %cst_10 : f32 to vector<256x128xf32>
    %35 = arith.addf %25, %34 : vector<256x128xf32>
    %36 = vector.broadcast %29 : vector<1x1xf32> to vector<256x128xf32>
    %37 = arith.divf %35, %36 : vector<256x128xf32>
    %38 = math.floor %37 : vector<256x128xf32>
    %39 = vector.broadcast %29 : vector<1x1xf32> to vector<256x128xf32>
    %40 = arith.mulf %38, %39 : vector<256x128xf32>
    %41 = arith.subf %25, %40 : vector<256x128xf32>
    %cst_11 = arith.constant 5.000000e-01 : f32
    %42 = vector.broadcast %cst_11 : f32 to vector<256x128xf32>
    %43 = arith.addf %41, %42 : vector<256x128xf32>
    %44 = vector.broadcast %33 : vector<1x1xf32> to vector<256x128xf32>
    %45 = arith.divf %43, %44 : vector<256x128xf32>
    %46 = math.floor %45 : vector<256x128xf32>
    %47 = vector.broadcast %33 : vector<1x1xf32> to vector<256x128xf32>
    %48 = arith.mulf %46, %47 : vector<256x128xf32>
    %49 = arith.subf %41, %48 : vector<256x128xf32>
    %cst_12 = arith.constant 5.000000e-01 : f32
    %50 = vector.broadcast %cst_12 : f32 to vector<256x128xf32>
    %51 = arith.subf %49, %50 : vector<256x128xf32>
    %52 = vector.broadcast %15 : vector<1x128xf32> to vector<256x128xf32>
    %53 = arith.mulf %51, %52 : vector<256x128xf32>
    %cst_13 = arith.constant 5.000000e-01 : f32
    %54 = vector.broadcast %cst_13 : f32 to vector<256x128xf32>
    %55 = arith.subf %46, %54 : vector<256x128xf32>
    %56 = vector.broadcast %16 : vector<1x128xf32> to vector<256x128xf32>
    %57 = arith.mulf %55, %56 : vector<256x128xf32>
    %58 = arith.addf %53, %57 : vector<256x128xf32>
    %cst_14 = arith.constant 2.000000e+00 : f32
    %59 = vector.broadcast %cst_14 : f32 to vector<256x128xf32>
    %60 = arith.mulf %14, %59 : vector<256x128xf32>
    %61 = vector.broadcast %17 : vector<1x128xf32> to vector<256x128xf32>
    %62 = arith.mulf %14, %61 : vector<256x128xf32>
    %63 = arith.addf %60, %58 : vector<256x128xf32>
    %64 = vector.broadcast %18 : vector<1x128xf32> to vector<256x128xf32>
    %65 = arith.mulf %63, %64 : vector<256x128xf32>
    %66 = arith.addf %62, %65 : vector<256x128xf32>
    %67 = arith.mulf %60, %60 : vector<256x128xf32>
    %68 = vector.broadcast %19 : vector<1x128xf32> to vector<256x128xf32>
    %69 = arith.mulf %67, %68 : vector<256x128xf32>
    %70 = arith.addf %66, %69 : vector<256x128xf32>
    %c0_15 = arith.constant 0 : index
    %c0_16 = arith.constant 0 : index
    %71 = vector.load %arg9[%c0_15, %c0_16] : memref<256x128xf32, #tpu.memory_space<vmem>>, vector<256x128xf32>
    tpu.vector_store %arg9[%c0_15, %c0_16], %70 {strides = array<i32>} : memref<256x128xf32, #tpu.memory_space<vmem>>, vector<256x128xf32>,
    return
  }
  func.func @transform_0(%arg0: i32, %arg1: memref<4xi32, #tpu.memory_space<smem>>, %arg2: memref<4xi32, #tpu.memory_space<smem>>, %arg3: memref<4xi32, #tpu.memory_space<smem>>, %arg4: memref<4xi32, #tpu.memory_space<smem>>) -> (i32, i32) {
    %c0_i32 = arith.constant 0 : i32
    %c0_i32_0 = arith.constant 0 : i32
    return %arg0, %c0_i32 : i32, i32
  }
  func.func @transform_1(%arg0: i32, %arg1: memref<4xi32, #tpu.memory_space<smem>>, %arg2: memref<4xi32, #tpu.memory_space<smem>>, %arg3: memref<4xi32, #tpu.memory_space<smem>>, %arg4: memref<4xi32, #tpu.memory_space<smem>>) -> (i32, i32, i32) {
    %0 = arith.index_cast %arg0 : i32 to index
    %1 = memref.load %arg1[%0] : memref<4xi32, #tpu.memory_space<smem>>
    %c0_i32 = arith.constant 0 : i32
    %c0_i32_0 = arith.constant 0 : i32
    %c0_i32_1 = arith.constant 0 : i32
    return %1, %c0_i32, %c0_i32_0 : i32, i32, i32
  }
  func.func @transform_2(%arg0: i32, %arg1: memref<4xi32, #tpu.memory_space<smem>>, %arg2: memref<4xi32, #tpu.memory_space<smem>>, %arg3: memref<4xi32, #tpu.memory_space<smem>>, %arg4: memref<4xi32, #tpu.memory_space<smem>>) -> (i32, i32, i32) {
    %0 = arith.index_cast %arg0 : i32 to index
    %1 = memref.load %arg1[%0] : memref<4xi32, #tpu.memory_space<smem>>
    %c0_i32 = arith.constant 0 : i32
    %c0_i32_0 = arith.constant 0 : i32
    %c0_i32_1 = arith.constant 0 : i32
    return %1, %c0_i32, %c0_i32_0 : i32, i32, i32
  }
  func.func @transform_3(%arg0: i32, %arg1: memref<4xi32, #tpu.memory_space<smem>>, %arg2: memref<4xi32, #tpu.memory_space<smem>>, %arg3: memref<4xi32, #tpu.memory_space<smem>>, %arg4: memref<4xi32, #tpu.memory_space<smem>>) -> (i32, i32) {
    %c0_i32 = arith.constant 0 : i32
    %c0_i32_0 = arith.constant 0 : i32
    return %arg0, %c0_i32 : i32, i32
  }
  func.func @transform_4(%arg0: i32, %arg1: memref<4xi32, #tpu.memory_space<smem>>, %arg2: memref<4xi32, #tpu.memory_space<smem>>, %arg3: memref<4xi32, #tpu.memory_space<smem>>, %arg4: memref<4xi32, #tpu.memory_space<smem>>) -> (i32, i32) {
    %c0_i32 = arith.constant 0 : i32
    %c0_i32_0 = arith.constant 0 : i32
    return %arg0, %c0_i32 : i32, i32
  }
}

</mosaic_0001>

<llo_original>
// kernel: tpu_custom_call.1
$region0: #{tpu_custom_call.1}
  #allocation0 [shape = 'u32[]', space=smem, size = 0x4, offset = 0x4, fixed_abs, tag = 'smem constant byte address 0x4 - core index']
  #allocation1 [shape = 'u32[72,128]{1,0:T(1,128)}', space=vmem, size = 0x9000, scoped, tag = 'internal scratch']
  #allocation2 [shape = 's32[1]{0}', space=sflag, size = 0x4, scoped, tag = 'scoped memory for tpu_custom_call.1']
  #allocation3 [shape = 'u8[512]{0}', space=smem, size = 0x200, scoped, tag = 'prefetched SMEM operand 0']
  #allocation4 [shape = 'u8[512]{0}', space=smem, size = 0x200, scoped, tag = 'prefetched SMEM operand 1']
  #allocation5 [shape = 'u8[512]{0}', space=smem, size = 0x200, scoped, tag = 'prefetched SMEM operand 2']
  #allocation6 [shape = 'u8[512]{0}', space=smem, size = 0x200, scoped, tag = 'prefetched SMEM operand 3']
  %s0 = inlined_call_operand.hbm [shape: s32[4], index: 0, kind: input, shape index: {}]
  %s1 = inlined_call_operand.hbm [shape: s32[4], index: 1, kind: input, shape index: {}]
  %s2 = inlined_call_operand.vmem [shape: s32[4], index: 2, kind: input, shape index: {}]
  %s3 = inlined_call_operand.vmem [shape: s32[4], index: 3, kind: input, shape index: {}]
  %s4 = inlined_call_operand.hbm [shape: bf16[1024,128], index: 4, kind: input, shape index: {}]
  %s5 = inlined_call_operand.hbm [shape: bf16[3,128,128], index: 5, kind: input, shape index: {}]
  %s6 = inlined_call_operand.hbm [shape: f32[3,8,128], index: 6, kind: input, shape index: {}]
  %s7 = inlined_call_operand.hbm [shape: f32[1024,128], index: 7, kind: output, shape index: {0}]
  %s8 = inlined_call_operand.hbm [shape: f32[1024,128], index: 8, kind: output, shape index: {1}]
  %9 = xla_tuple %s7, %s8
  %s10 = sld [smem:[#allocation0]]
  $region65: #{tpu_custom_call.1} parent=0
    _
  %s12 = ssub.s32 1, %s10
  %s13 = scalar_select 0, %s12, %s10
  %s15 = sshll.u32 %s0, 4
  %s16 = int_to_ptr.hbm [resolvable:$true] %s15
  %18 = dma.hbm_to_smem %s16, 16, [#allocation3], [#allocation2]
  %s20 = sshll.u32 %s1, 4
  %s21 = int_to_ptr.hbm [resolvable:$true] %s20
  %23 = dma.hbm_to_smem %s21, 16, [#allocation4], [#allocation2]
  %s25 = sshll.u32 %s2, 4
  %s26 = int_to_ptr.vmem [resolvable:$true] %s25
  %28 = dma.vmem_to_smem %s26, 16, [#allocation5], [#allocation2]
  %s30 = sshll.u32 %s3, 4
  %s31 = int_to_ptr.vmem [resolvable:$true] %s30
  %33 = dma.vmem_to_smem %s31, 16, [#allocation6], [#allocation2]
  %35 = dma.done [#allocation2], 64
  %36 = sfence
  $region1: #{tpu_custom_call.1} parent=0
    #allocation7 [shape = 'u8[131072]{0}', space=vmem, size = 0x20000, scoped, tag = 'input window, operand 4']
    #allocation8 [shape = 's32[2]{0}', space=sflag, size = 0x8, scoped, tag = 'scoped memory for tpu_custom_call.1']
    #allocation9 [shape = 's32[2]{0}', space=sflag, size = 0x8, scoped, tag = 'scoped memory for tpu_custom_call.1']
    #allocation10 [shape = 'u8[65536]{0}', space=vmem, size = 0x10000, scoped, tag = 'input window, operand 5']
    #allocation11 [shape = 's32[2]{0}', space=sflag, size = 0x8, scoped, tag = 'scoped memory for tpu_custom_call.1']
    #allocation12 [shape = 'u8[8192]{0}', space=vmem, size = 0x2000, scoped, tag = 'input window, operand 6']
    #allocation13 [shape = 'u8[262144]{0}', space=vmem, size = 0x40000, scoped, tag = 'output window, operand 0']
    #allocation14 [shape = 'u8[262144]{0}', space=vmem, size = 0x40000, scoped, tag = 'output window, operand 1']
    #allocation15 [shape = 's32[2]{0}', space=sflag, size = 0x8, scoped, tag = 'scoped memory for tpu_custom_call.1']
    %37 = vsyncpa [#allocation8], 0
    %s38 = scalar_lea.sflag [#allocation8], 1
    %39 = vsyncpa %s38, 0
    %40 = vsyncpa [#allocation11], 0
    %s41 = scalar_lea.sflag [#allocation11], 1
    %42 = vsyncpa %s41, 0
    %43 = vsyncpa [#allocation9], 0
    %s44 = scalar_lea.sflag [#allocation9], 1
    %45 = vsyncpa %s44, 0
    %46 = vsyncpa [#allocation15], 0
    %s47 = scalar_lea.sflag [#allocation15], 1
    %48 = vsyncpa %s47, 0
    loop: start=0, step=1, limit=6
    $region2: #{tpu_custom_call.1} parent=1 // loop_pre_header
      _
    $region3: #{tpu_custom_call.1} parent=1 // loop_header
      %s50 = sphi 0, %s54
      %p51 = scmp.ge.s32.totalorder %s50, 6
      %s60 = sphi 0, %s62
      %s63 = sphi 0, %s60
      %s64 = sphi 0, %s63
      %s80 = sphi 0, %s64
      %s88 = sphi 0, %s90
      %s91 = sphi 0, %s88
      %s92 = sphi 0, %s91
      %s108 = sphi 0, %s92
      %s116 = sphi 0, %s118
      %s119 = sphi 0, %s116
      %s120 = sphi 0, %s119
      %s136 = sphi 0, %s120
      %s142 = sphi 0, %s144
      %s145 = sphi 0, %s142
      %s146 = sphi 0, %s145
      %s162 = sphi 0, %s146
      %s168 = sphi 0, %s170
      %s171 = sphi 0, %s168
      %s172 = sphi 0, %s171
      %s188 = sphi 0, %s172
    $region4: #{tpu_custom_call.1} parent=1 // loop_header_branch
      %53 = sbr.rel (%p51) target = $region8
    $region5: #{tpu_custom_call.1} parent=1 // loop_body
      %s55 = ssub.s32 %s50, 1
      %s56 = ssub.s32 %s50, 2
      %s57 = sadd.s32 %s50, 1
      %s58 = ssub.s32 %s50, %s57
      %p59 = scmp.eq.s32.totalorder %s58, 0
      %s61 = sadd.s32 %s60, 1
      %s62 = scalar_select %p59, %s60, %s61
      %p65 = pneg %p59
      %p66 = scmp.eq.s32.totalorder %s50, 3
      %p67 = por %p65, %p66
      %p68 = scmp.ne.s32.totalorder %s60, %s63
      %p69 = scmp.eq.s32.totalorder %s50, 0
      %p70 = por %p68, %p69
      %p71 = scmp.ne.s32.totalorder %s60, %s63
      %p72 = scmp.eq.s32.totalorder %s55, 3
      %p73 = por %p71, %p72
      %p74 = scmp.ne.s32.totalorder %s63, %s64
      %p75 = scmp.eq.s32.totalorder %s55, 0
      %p76 = por %p74, %p75
      %p77 = scmp.ne.s32.totalorder %s63, %s64
      %p78 = scmp.eq.s32.totalorder %s56, 3
      %p79 = por %p77, %p78
      %p81 = scmp.ne.s32.totalorder %s64, %s80
      %p82 = scmp.eq.s32.totalorder %s56, 0
      %p83 = por %p81, %p82
      %s84 = sld [smem:[#allocation3 + %s50]]
      %s85 = sld [smem:[#allocation3 + %s57]]
      %s86 = ssub.s32 %s84, %s85
      %p87 = scmp.eq.s32.totalorder %s86, 0
      %s89 = sadd.s32 %s88, 1
      %s90 = scalar_select %p87, %s88, %s89
      %p93 = pneg %p87
      %p94 = scmp.eq.s32.totalorder %s50, 3
      %p95 = por %p93, %p94
      %p96 = scmp.ne.s32.totalorder %s88, %s91
      %p97 = scmp.eq.s32.totalorder %s50, 0
      %p98 = por %p96, %p97
      %p99 = scmp.ne.s32.totalorder %s88, %s91
      %p100 = scmp.eq.s32.totalorder %s55, 3
      %p101 = por %p99, %p100
      %p102 = scmp.ne.s32.totalorder %s91, %s92
      %p103 = scmp.eq.s32.totalorder %s55, 0
      %p104 = por %p102, %p103
      %p105 = scmp.ne.s32.totalorder %s91, %s92
      %p106 = scmp.eq.s32.totalorder %s56, 3
      %p107 = por %p105, %p106
      %p109 = scmp.ne.s32.totalorder %s92, %s108
      %p110 = scmp.eq.s32.totalorder %s56, 0
      %p111 = por %p109, %p110
      %s112 = sld [smem:[#allocation3 + %s50]]
      %s113 = sld [smem:[#allocation3 + %s57]]
      %s114 = ssub.s32 %s112, %s113
      %p115 = scmp.eq.s32.totalorder %s114, 0
      %s117 = sadd.s32 %s116, 1
      %s118 = scalar_select %p115, %s116, %s117
      %p121 = pneg %p115
      %p122 = scmp.eq.s32.totalorder %s50, 3
      %p123 = por %p121, %p122
      %p124 = scmp.ne.s32.totalorder %s116, %s119
      %p125 = scmp.eq.s32.totalorder %s50, 0
      %p126 = por %p124, %p125
      %p127 = scmp.ne.s32.totalorder %s116, %s119
      %p128 = scmp.eq.s32.totalorder %s55, 3
      %p129 = por %p127, %p128
      %p130 = scmp.ne.s32.totalorder %s119, %s120
      %p131 = scmp.eq.s32.totalorder %s55, 0
      %p132 = por %p130, %p131
      %p133 = scmp.ne.s32.totalorder %s119, %s120
      %p134 = scmp.eq.s32.totalorder %s56, 3
      %p135 = por %p133, %p134
      %p137 = scmp.ne.s32.totalorder %s120, %s136
      %p138 = scmp.eq.s32.totalorder %s56, 0
      %p139 = por %p137, %p138
      %s140 = ssub.s32 %s50, %s57
      %p141 = scmp.eq.s32.totalorder %s140, 0
      %s143 = sadd.s32 %s142, 1
      %s144 = scalar_select %p141, %s142, %s143
      %p147 = pneg %p141
      %p148 = scmp.eq.s32.totalorder %s50, 3
      %p149 = por %p147, %p148
      %p150 = scmp.ne.s32.totalorder %s142, %s145
      %p151 = scmp.eq.s32.totalorder %s50, 0
      %p152 = por %p150, %p151
      %p153 = scmp.ne.s32.totalorder %s142, %s145
      %p154 = scmp.eq.s32.totalorder %s55, 3
      %p155 = por %p153, %p154
      %p156 = scmp.ne.s32.totalorder %s145, %s146
      %p157 = scmp.eq.s32.totalorder %s55, 0
      %p158 = por %p156, %p157
      %p159 = scmp.ne.s32.totalorder %s145, %s146
      %p160 = scmp.eq.s32.totalorder %s56, 3
      %p161 = por %p159, %p160
      %p163 = scmp.ne.s32.totalorder %s146, %s162
      %p164 = scmp.eq.s32.totalorder %s56, 0
      %p165 = por %p163, %p164
      %s166 = ssub.s32 %s50, %s57
      %p167 = scmp.eq.s32.totalorder %s166, 0
      %s169 = sadd.s32 %s168, 1
      %s170 = scalar_select %p167, %s168, %s169
      %p173 = pneg %p167
      %p174 = scmp.eq.s32.totalorder %s50, 3
      %p175 = por %p173, %p174
      %p176 = scmp.ne.s32.totalorder %s168, %s171
      %p177 = scmp.eq.s32.totalorder %s50, 0
      %p178 = por %p176, %p177
      %p179 = scmp.ne.s32.totalorder %s168, %s171
      %p180 = scmp.eq.s32.totalorder %s55, 3
      %p181 = por %p179, %p180
      %p182 = scmp.ne.s32.totalorder %s171, %s172
      %p183 = scmp.eq.s32.totalorder %s55, 0
      %p184 = por %p182, %p183
      %p185 = scmp.ne.s32.totalorder %s171, %s172
      %p186 = scmp.eq.s32.totalorder %s56, 3
      %p187 = por %p185, %p186
      %p189 = scmp.ne.s32.totalorder %s172, %s188
      %p190 = scmp.eq.s32.totalorder %s56, 0
      %p191 = por %p189, %p190
      %p192 = scmp.le.s32.totalorder 1, %s50
      %p193 = scmp.lt.s32.totalorder %s50, 5
      %p194 = pnand %p192, %p193
      %p195 = pneg %p194
      // Predicated region
      $region9: #{tpu_custom_call.1} parent=5 // pred_check
        _
      $region10: #{tpu_custom_call.1} parent=5 // pred_check_branch
        %197 = sbr.rel (%p194) target = $region12
      $region11: #{tpu_custom_call.1} parent=5 // pred_region
        %s198 = ssub.s32 %s50, 1
      $region12: #{tpu_custom_call.1} parent=5 // pred_fallthru
        _
      %p199 = scmp.lt.s32.totalorder %s50, 4
      // Predicated region
      $region13: #{tpu_custom_call.1} parent=5 // pred_check
        %p200 = pneg %p199
      $region14: #{tpu_custom_call.1} parent=5 // pred_check_branch
        %202 = sbr.rel (%p200) target = $region16
      $region15: #{tpu_custom_call.1} parent=5 // pred_region
        // Predicated region
        $region17: #{tpu_custom_call.1} parent=15 // pred_check
          %p203 = pneg %p70
        $region18: #{tpu_custom_call.1} parent=15 // pred_check_branch
          %205 = sbr.rel (%p203) target = $region20
        $region19: #{tpu_custom_call.1} parent=15 // pred_region
          %s206 = sand.u32 %s60, 1
          %s207 = scalar_lea.sflag [#allocation8], %s206
          %s208 = sand.u32 %s60, 1
          %s209 = smul.addr %s208, 128
          %s210 = scalar_lea.vmem [#allocation7], %s209
          %s211 = smul.u32 32, %s50
          %213 = vsyncadd %s207, 0
          %s214 = smul.addr %s211, 4
          %s215 = scalar_lea.hbm %s4, %s214
          %s216 = sshll.u32 %s215, 4
          %s217 = int_to_ptr.hbm [resolvable:$true] %s216
          %s218 = sshll.u32 %s210, 4
          %s219 = int_to_ptr.vmem [resolvable:$true] %s218
          %224 = dma.hbm_to_vmem [thread:$0]  %s217, 2048, %s219, %s207, 64, 64, 4
        $region20: #{tpu_custom_call.1} parent=15 // pred_fallthru
          _
        // Predicated region
        $region21: #{tpu_custom_call.1} parent=15 // pred_check
          %p225 = pneg %p98
        $region22: #{tpu_custom_call.1} parent=15 // pred_check_branch
          %227 = sbr.rel (%p225) target = $region24
        $region23: #{tpu_custom_call.1} parent=15 // pred_region
          %s228 = sand.u32 %s50, 1
          %s229 = scalar_lea.sflag [#allocation11], %s228
          %s230 = sand.u32 %s88, 1
          %s231 = smul.addr %s230, 64
          %s232 = scalar_lea.vmem [#allocation10], %s231
          %s233 = sld [smem:[#allocation3 + %s50]]
          %235 = vsyncadd %s229, 0
          %s236 = smul.addr %s233, 16
          %s237 = smul.addr %s236, 4
          %s238 = scalar_lea.hbm %s5, %s237
          %s239 = sshll.u32 %s238, 4
          %s240 = int_to_ptr.hbm [resolvable:$true] %s239
          %s241 = sshll.u32 %s232, 4
          %s242 = int_to_ptr.vmem [resolvable:$true] %s241
          %247 = dma.hbm_to_vmem [thread:$0]  %s240, 1024, %s242, %s229, 64, 64, 4
        $region24: #{tpu_custom_call.1} parent=15 // pred_fallthru
          _
        // Predicated region
        $region25: #{tpu_custom_call.1} parent=15 // pred_check
          %p248 = pneg %p126
        $region26: #{tpu_custom_call.1} parent=15 // pred_check_branch
          %250 = sbr.rel (%p248) target = $region28
        $region27: #{tpu_custom_call.1} parent=15 // pred_region
          %s251 = sand.u32 %s50, 1
          %s252 = scalar_lea.sflag [#allocation11], %s251
          %s253 = sand.u32 %s116, 1
          %s254 = smul.addr %s253, 8
          %s255 = scalar_lea.vmem [#allocation12], %s254
          %s256 = sld [smem:[#allocation3 + %s50]]
          %258 = vsyncadd %s252, 0
          %s259 = smul.addr %s256, 8
          %s260 = scalar_lea.hbm %s6, %s259
          %s262 = sshll.u32 %s260, 4
          %s263 = int_to_ptr.hbm [resolvable:$true] %s262
          %s264 = sshll.u32 %s255, 4
          %s265 = int_to_ptr.vmem [resolvable:$true] %s264
          %267 = dma.hbm_to_vmem [thread:$0]  %s263, 128, %s265, %s252
        $region28: #{tpu_custom_call.1} parent=15 // pred_fallthru
          _
      $region16: #{tpu_custom_call.1} parent=5 // pred_fallthru
        _
      %p268 = scmp.le.s32.totalorder 1, %s50
      %p269 = scmp.lt.s32.totalorder %s50, 5
      %p270 = pnand %p268, %p269
      %p271 = pneg %p270
      // Predicated region
      $region29: #{tpu_custom_call.1} parent=5 // pred_check
        _
      $region30: #{tpu_custom_call.1} parent=5 // pred_check_branch
        %273 = sbr.rel (%p270) target = $region32
      $region31: #{tpu_custom_call.1} parent=5 // pred_region
        %s274 = ssub.s32 %s50, 1
        %s275 = sand.u32 %s63, 1
        %s276 = scalar_lea.sflag [#allocation8], %s275
        %s277 = sand.u32 %s63, 1
        %s278 = smul.addr %s277, 128
        %s279 = scalar_lea.vmem [#allocation7], %s278
        // Predicated region
        $region33: #{tpu_custom_call.1} parent=31 // pred_check
          %p280 = pneg %p76
        $region34: #{tpu_custom_call.1} parent=31 // pred_check_branch
          %282 = sbr.rel (%p280) target = $region36
        $region35: #{tpu_custom_call.1} parent=31 // pred_region
          %284 = dma.done %s276, 2048
        $region36: #{tpu_custom_call.1} parent=31 // pred_fallthru
          _
        %s285 = sand.u32 %s55, 1
        %s286 = scalar_lea.sflag [#allocation11], %s285
        %s287 = sand.u32 %s91, 1
        %s288 = smul.addr %s287, 64
        %s289 = scalar_lea.vmem [#allocation10], %s288
        // Predicated region
        $region37: #{tpu_custom_call.1} parent=31 // pred_check
          %p290 = pneg %p104
        $region38: #{tpu_custom_call.1} parent=31 // pred_check_branch
          %292 = sbr.rel (%p290) target = $region40
        $region39: #{tpu_custom_call.1} parent=31 // pred_region
          %294 = dma.done %s286, 1024
        $region40: #{tpu_custom_call.1} parent=31 // pred_fallthru
          _
        %s295 = sand.u32 %s55, 1
        %s296 = scalar_lea.sflag [#allocation11], %s295
        %s297 = sand.u32 %s119, 1
        %s298 = smul.addr %s297, 8
        %s299 = scalar_lea.vmem [#allocation12], %s298
        // Predicated region
        $region41: #{tpu_custom_call.1} parent=31 // pred_check
          %p300 = pneg %p132
        $region42: #{tpu_custom_call.1} parent=31 // pred_check_branch
          %302 = sbr.rel (%p300) target = $region44
        $region43: #{tpu_custom_call.1} parent=31 // pred_region
          %304 = dma.done %s296, 128
        $region44: #{tpu_custom_call.1} parent=31 // pred_fallthru
          _
        %s305 = sand.u32 %s63, 1
        %s306 = scalar_lea.sflag [#allocation8], %s305
        %s307 = sand.u32 %s63, 1
        %s308 = smul.addr %s307, 128
        %s309 = scalar_lea.vmem [#allocation7], %s308
        %p310 = pneg %p76
        %p311 = pneg %p73
        %s312 = sand.u32 %s55, 1
        %s313 = scalar_lea.sflag [#allocation11], %s312
        %s314 = sand.u32 %s91, 1
        %s315 = smul.addr %s314, 64
        %s316 = scalar_lea.vmem [#allocation10], %s315
        %p317 = pneg %p104
        %p318 = pneg %p101
        %s319 = sand.u32 %s55, 1
        %s320 = scalar_lea.sflag [#allocation11], %s319
        %s321 = sand.u32 %s119, 1
        %s322 = smul.addr %s321, 8
        %s323 = scalar_lea.vmem [#allocation12], %s322
        %p324 = pneg %p132
        %p325 = pneg %p129
        %p326 = pneg %p158
        %p327 = pneg %p155
        %s328 = sand.u32 %s145, 1
        %s329 = scalar_lea.sflag [#allocation9], %s328
        %s330 = sand.u32 %s145, 1
        %s331 = smul.addr %s330, 256
        %s332 = scalar_lea.vmem [#allocation13], %s331
        %p333 = pneg %p184
        %p334 = pneg %p181
        %s335 = sand.u32 %s171, 1
        %s336 = scalar_lea.sflag [#allocation15], %s335
        %s337 = sand.u32 %s171, 1
        %s338 = smul.addr %s337, 256
        %s339 = scalar_lea.vmem [#allocation14], %s338
        %s340 = smul.u32 32, %s55
        %s341 = sld [smem:[#allocation3 + %s55]]
        %s342 = sld [smem:[#allocation3 + %s55]]
        %s343 = smul.u32 32, %s55
        %s344 = smul.u32 32, %s55
        %v345 = vld [vmem:[%s299] sm:$0xff]
        %v346 = vld [vmem:[%s279] sm:$0xf]
        %v347 = vld [vmem:[%s279 + $0x4] sm:$0xf]
        %v348 = vld [vmem:[%s279 + $0x8] sm:$0xf]
        %v349 = vld [vmem:[%s279 + $0xc] sm:$0xf]
        %v350 = vld [vmem:[%s279 + $0x10] sm:$0xf]
        %v351 = vld [vmem:[%s279 + $0x14] sm:$0xf]
        %v352 = vld [vmem:[%s279 + $0x18] sm:$0xf]
        %v353 = vld [vmem:[%s279 + $0x1c] sm:$0xf]
        %v354 = vld [vmem:[%s279 + $0x20] sm:$0xf]
        %v355 = vld [vmem:[%s279 + $0x24] sm:$0xf]
        %v356 = vld [vmem:[%s279 + $0x28] sm:$0xf]
        %v357 = vld [vmem:[%s279 + $0x2c] sm:$0xf]
        %v358 = vld [vmem:[%s279 + $0x30] sm:$0xf]
        %v359 = vld [vmem:[%s279 + $0x34] sm:$0xf]
        %v360 = vld [vmem:[%s279 + $0x38] sm:$0xf]
        %v361 = vld [vmem:[%s279 + $0x3c] sm:$0xf]
        %v362 = vld [vmem:[%s279 + $0x40] sm:$0xf]
        %v363 = vld [vmem:[%s279 + $0x44] sm:$0xf]
        %v364 = vld [vmem:[%s279 + $0x48] sm:$0xf]
        %v365 = vld [vmem:[%s279 + $0x4c] sm:$0xf]
        %v366 = vld [vmem:[%s279 + $0x50] sm:$0xf]
        %v367 = vld [vmem:[%s279 + $0x54] sm:$0xf]
        %v368 = vld [vmem:[%s279 + $0x58] sm:$0xf]
        %v369 = vld [vmem:[%s279 + $0x5c] sm:$0xf]
        %v370 = vld [vmem:[%s279 + $0x60] sm:$0xf]
        %v371 = vld [vmem:[%s279 + $0x64] sm:$0xf]
        %v372 = vld [vmem:[%s279 + $0x68] sm:$0xf]
        %v373 = vld [vmem:[%s279 + $0x6c] sm:$0xf]
        %v374 = vld [vmem:[%s279 + $0x70] sm:$0xf]
        %v375 = vld [vmem:[%s279 + $0x74] sm:$0xf]
        %v376 = vld [vmem:[%s279 + $0x78] sm:$0xf]
        %v377 = vld [vmem:[%s279 + $0x7c] sm:$0xf]
        %v378 = vld [vmem:[%s289] sm:$0xf]
        %v379 = vld [vmem:[%s289 + $0x4] sm:$0xf]
        %v380 = vld [vmem:[%s289 + $0x8] sm:$0xf]
        %v381 = vld [vmem:[%s289 + $0xc] sm:$0xf]
        %v382 = vld [vmem:[%s289 + $0x10] sm:$0xf]
        %v383 = vld [vmem:[%s289 + $0x14] sm:$0xf]
        %v384 = vld [vmem:[%s289 + $0x18] sm:$0xf]
        %v385 = vld [vmem:[%s289 + $0x1c] sm:$0xf]
        %v386 = vld [vmem:[%s289 + $0x20] sm:$0xf]
        %v387 = vld [vmem:[%s289 + $0x24] sm:$0xf]
        %v388 = vld [vmem:[%s289 + $0x28] sm:$0xf]
        %v389 = vld [vmem:[%s289 + $0x2c] sm:$0xf]
        %v390 = vld [vmem:[%s289 + $0x30] sm:$0xf]
        %v391 = vld [vmem:[%s289 + $0x34] sm:$0xf]
        %v392 = vld [vmem:[%s289 + $0x38] sm:$0xf]
        %v393 = vld [vmem:[%s289 + $0x3c] sm:$0xf]
        %v394 = vperm.slane %v345, 0
        %v427 = vunpack.c.l.b16 %v346
        %v428 = vunpack.c.l.b16 %v347
        %v429 = vunpack.c.l.b16 %v348
        %v430 = vunpack.c.l.b16 %v349
        %v431 = vunpack.c.l.b16 %v350
        %v432 = vunpack.c.l.b16 %v351
        %v433 = vunpack.c.l.b16 %v352
        %v434 = vunpack.c.l.b16 %v353
        %v435 = vunpack.c.l.b16 %v354
        %v436 = vunpack.c.l.b16 %v355
        %v437 = vunpack.c.l.b16 %v356
        %v438 = vunpack.c.l.b16 %v357
        %v439 = vunpack.c.l.b16 %v358
        %v440 = vunpack.c.l.b16 %v359
        %v441 = vunpack.c.l.b16 %v360
        %v442 = vunpack.c.l.b16 %v361
        %v443 = vunpack.c.l.b16 %v362
        %v444 = vunpack.c.l.b16 %v363
        %v445 = vunpack.c.l.b16 %v364
        %v446 = vunpack.c.l.b16 %v365
        %v447 = vunpack.c.l.b16 %v366
        %v448 = vunpack.c.l.b16 %v367
        %v449 = vunpack.c.l.b16 %v368
        %v450 = vunpack.c.l.b16 %v369
        %v451 = vunpack.c.l.b16 %v370
        %v452 = vunpack.c.l.b16 %v371
        %v453 = vunpack.c.l.b16 %v372
        %v454 = vunpack.c.l.b16 %v373
        %v455 = vunpack.c.l.b16 %v374
        %v456 = vunpack.c.l.b16 %v375
        %v457 = vunpack.c.l.b16 %v376
        %v458 = vunpack.c.l.b16 %v377
        %v459 = vpack.c.b16 %v428, %v427
        %v460 = vpack.c.b16 %v430, %v429
        %v461 = vpack.c.b16 %v432, %v431
        %v462 = vpack.c.b16 %v434, %v433
        %v463 = vpack.c.b16 %v436, %v435
        %v464 = vpack.c.b16 %v438, %v437
        %v465 = vpack.c.b16 %v440, %v439
        %v466 = vpack.c.b16 %v442, %v441
        %v467 = vpack.c.b16 %v444, %v443
        %v468 = vpack.c.b16 %v446, %v445
        %v469 = vpack.c.b16 %v448, %v447
        %v470 = vpack.c.b16 %v450, %v449
        %v471 = vpack.c.b16 %v452, %v451
        %v472 = vpack.c.b16 %v454, %v453
        %v473 = vpack.c.b16 %v456, %v455
        %v474 = vpack.c.b16 %v458, %v457
        %v507 = vunpack.c.l.b16 %v378
        %v508 = vunpack.c.l.b16 %v379
        %v509 = vunpack.c.l.b16 %v380
        %v510 = vunpack.c.l.b16 %v381
        %v511 = vunpack.c.l.b16 %v382
        %v512 = vunpack.c.l.b16 %v383
        %v513 = vunpack.c.l.b16 %v384
        %v514 = vunpack.c.l.b16 %v385
        %v515 = vunpack.c.l.b16 %v386
        %v516 = vunpack.c.l.b16 %v387
        %v517 = vunpack.c.l.b16 %v388
        %v518 = vunpack.c.l.b16 %v389
        %v519 = vunpack.c.l.b16 %v390
        %v520 = vunpack.c.l.b16 %v391
        %v521 = vunpack.c.l.b16 %v392
        %v522 = vunpack.c.l.b16 %v393
        %v523 = vpack.c.b16 %v508, %v507
        %v524 = vpack.c.b16 %v510, %v509
        %v525 = vpack.c.b16 %v512, %v511
        %v526 = vpack.c.b16 %v514, %v513
        %v527 = vpack.c.b16 %v516, %v515
        %v528 = vpack.c.b16 %v518, %v517
        %v529 = vpack.c.b16 %v520, %v519
        %v530 = vpack.c.b16 %v522, %v521
        %539 = vmatpush.bf16.msra.mxu0 %v530
        %540 = vmatpush.bf16.msra.mxu0 %v529
        %541 = vmatpush.bf16.msra.mxu0 %v528
        %542 = vmatpush.bf16.msra.mxu0 %v527
        %543 = vmatpush.bf16.msra.mxu0 %v526
        %544 = vmatpush.bf16.msra.mxu0 %v525
        %545 = vmatpush.bf16.msra.mxu0 %v524
        %546 = vmatpush.bf16.msra.mxu0 %v523
        %547 = vmatmul.bf16.gmra.mxu0 %v459
        %v548 = vpop.f32.mrf.mxu0
        %v549 = vadd.f32 %v394, %v548
        %v550 = vpop.f32.mrf.mxu0
        %v551 = vadd.f32 %v394, %v550
        %552 = vmatmul.bf16.gmra.mxu0 %v460
        %v553 = vpop.f32.mrf.mxu0
        %v554 = vadd.f32 %v394, %v553
        %v555 = vpop.f32.mrf.mxu0
        %v556 = vadd.f32 %v394, %v555
        %557 = vmatmul.bf16.gmra.mxu0 %v461
        %v558 = vpop.f32.mrf.mxu0
        %v559 = vadd.f32 %v394, %v558
        %v560 = vpop.f32.mrf.mxu0
        %v561 = vadd.f32 %v394, %v560
        %562 = vmatmul.bf16.gmra.mxu0 %v462
        %v563 = vpop.f32.mrf.mxu0
        %v564 = vadd.f32 %v394, %v563
        %v565 = vpop.f32.mrf.mxu0
        %v566 = vadd.f32 %v394, %v565
        %567 = vmatmul.bf16.gmra.mxu0 %v463
        %v568 = vpop.f32.mrf.mxu0
        %v569 = vadd.f32 %v394, %v568
        %v570 = vpop.f32.mrf.mxu0
        %v571 = vadd.f32 %v394, %v570
        %572 = vmatmul.bf16.gmra.mxu0 %v464
        %v573 = vpop.f32.mrf.mxu0
        %v574 = vadd.f32 %v394, %v573
        %v575 = vpop.f32.mrf.mxu0
        %v576 = vadd.f32 %v394, %v575
        %577 = vmatmul.bf16.gmra.mxu0 %v465
        %v578 = vpop.f32.mrf.mxu0
        %v579 = vadd.f32 %v394, %v578
        %v580 = vpop.f32.mrf.mxu0
        %v581 = vadd.f32 %v394, %v580
        %582 = vmatmul.bf16.gmra.mxu0 %v466
        %v583 = vpop.f32.mrf.mxu0
        %v584 = vadd.f32 %v394, %v583
        %v585 = vpop.f32.mrf.mxu0
        %v586 = vadd.f32 %v394, %v585
        %587 = vmatmul.bf16.gmra.mxu0 %v467
        %v588 = vpop.f32.mrf.mxu0
        %v589 = vadd.f32 %v394, %v588
        %v590 = vpop.f32.mrf.mxu0
        %v591 = vadd.f32 %v394, %v590
        %592 = vmatmul.bf16.gmra.mxu0 %v468
        %v593 = vpop.f32.mrf.mxu0
        %v594 = vadd.f32 %v394, %v593
        %v595 = vpop.f32.mrf.mxu0
        %v596 = vadd.f32 %v394, %v595
        %597 = vmatmul.bf16.gmra.mxu0 %v469
        %v598 = vpop.f32.mrf.mxu0
        %v599 = vadd.f32 %v394, %v598
        %v600 = vpop.f32.mrf.mxu0
        %v601 = vadd.f32 %v394, %v600
        %602 = vmatmul.bf16.gmra.mxu0 %v470
        %v603 = vpop.f32.mrf.mxu0
        %v604 = vadd.f32 %v394, %v603
        %v605 = vpop.f32.mrf.mxu0
        %v606 = vadd.f32 %v394, %v605
        %607 = vmatmul.bf16.gmra.mxu0 %v471
        %v608 = vpop.f32.mrf.mxu0
        %v609 = vadd.f32 %v394, %v608
        %v610 = vpop.f32.mrf.mxu0
        %v611 = vadd.f32 %v394, %v610
        %612 = vmatmul.bf16.gmra.mxu0 %v472
        %v613 = vpop.f32.mrf.mxu0
        %v614 = vadd.f32 %v394, %v613
        %v615 = vpop.f32.mrf.mxu0
        %v616 = vadd.f32 %v394, %v615
        %617 = vmatmul.bf16.gmra.mxu0 %v473
        %v618 = vpop.f32.mrf.mxu0
        %v619 = vadd.f32 %v394, %v618
        %v620 = vpop.f32.mrf.mxu0
        %v621 = vadd.f32 %v394, %v620
        %622 = vmatmul.bf16.gmra.mxu0 %v474
        %v623 = vpop.f32.mrf.mxu0
        %v624 = vadd.f32 %v394, %v623
        %v625 = vpop.f32.mrf.mxu0
        %v626 = vadd.f32 %v394, %v625
        %627 = vdwg.mxu0
        %628 = vst [vmem:[%s332] sm:$0xff] %v549
        %629 = vst [vmem:[%s332 + $0x8] sm:$0xff] %v551
        %630 = vst [vmem:[%s332 + $0x10] sm:$0xff] %v554
        %631 = vst [vmem:[%s332 + $0x18] sm:$0xff] %v556
        %632 = vst [vmem:[%s332 + $0x20] sm:$0xff] %v559
        %633 = vst [vmem:[%s332 + $0x28] sm:$0xff] %v561
        %634 = vst [vmem:[%s332 + $0x30] sm:$0xff] %v564
        %635 = vst [vmem:[%s332 + $0x38] sm:$0xff] %v566
        %636 = vst [vmem:[%s332 + $0x40] sm:$0xff] %v569
        %637 = vst [vmem:[%s332 + $0x48] sm:$0xff] %v571
        %638 = vst [vmem:[%s332 + $0x50] sm:$0xff] %v574
        %639 = vst [vmem:[%s332 + $0x58] sm:$0xff] %v576
        %640 = vst [vmem:[%s332 + $0x60] sm:$0xff] %v579
        %641 = vst [vmem:[%s332 + $0x68] sm:$0xff] %v581
        %642 = vst [vmem:[%s332 + $0x70] sm:$0xff] %v584
        %643 = vst [vmem:[%s332 + $0x78] sm:$0xff] %v586
        %644 = vst [vmem:[%s332 + $0x80] sm:$0xff] %v589
        %645 = vst [vmem:[%s332 + $0x88] sm:$0xff] %v591
        %646 = vst [vmem:[%s332 + $0x90] sm:$0xff] %v594
        %647 = vst [vmem:[%s332 + $0x98] sm:$0xff] %v596
        %648 = vst [vmem:[%s332 + $0xa0] sm:$0xff] %v599
        %649 = vst [vmem:[%s332 + $0xa8] sm:$0xff] %v601
        %650 = vst [vmem:[%s332 + $0xb0] sm:$0xff] %v604
        %651 = vst [vmem:[%s332 + $0xb8] sm:$0xff] %v606
        %652 = vst [vmem:[%s332 + $0xc0] sm:$0xff] %v609
        %653 = vst [vmem:[%s332 + $0xc8] sm:$0xff] %v611
        %654 = vst [vmem:[%s332 + $0xd0] sm:$0xff] %v614
        %655 = vst [vmem:[%s332 + $0xd8] sm:$0xff] %v616
        %656 = vst [vmem:[%s332 + $0xe0] sm:$0xff] %v619
        %657 = vst [vmem:[%s332 + $0xe8] sm:$0xff] %v621
        %658 = vst [vmem:[%s332 + $0xf0] sm:$0xff] %v624
        %659 = vst [vmem:[%s332 + $0xf8] sm:$0xff] %v626
        %v660 = vxor.u32 %v549, 2147483648
        %v661 = vxor.u32 %v551, 2147483648
        %v662 = vxor.u32 %v554, 2147483648
        %v663 = vxor.u32 %v556, 2147483648
        %v664 = vxor.u32 %v559, 2147483648
        %v665 = vxor.u32 %v561, 2147483648
        %v666 = vxor.u32 %v564, 2147483648
        %v667 = vxor.u32 %v566, 2147483648
        %v668 = vxor.u32 %v569, 2147483648
        %v669 = vxor.u32 %v571, 2147483648
        %v670 = vxor.u32 %v574, 2147483648
        %v671 = vxor.u32 %v576, 2147483648
        %v672 = vxor.u32 %v579, 2147483648
        %v673 = vxor.u32 %v581, 2147483648
        %v674 = vxor.u32 %v584, 2147483648
        %v675 = vxor.u32 %v586, 2147483648
        %v676 = vxor.u32 %v589, 2147483648
        %v677 = vxor.u32 %v591, 2147483648
        %v678 = vxor.u32 %v594, 2147483648
        %v679 = vxor.u32 %v596, 2147483648
        %v680 = vxor.u32 %v599, 2147483648
        %v681 = vxor.u32 %v601, 2147483648
        %v682 = vxor.u32 %v604, 2147483648
        %v683 = vxor.u32 %v606, 2147483648
        %v684 = vxor.u32 %v609, 2147483648
        %v685 = vxor.u32 %v611, 2147483648
        %v686 = vxor.u32 %v614, 2147483648
        %v687 = vxor.u32 %v616, 2147483648
        %v688 = vxor.u32 %v619, 2147483648
        %v689 = vxor.u32 %v621, 2147483648
        %v690 = vxor.u32 %v624, 2147483648
        %v691 = vxor.u32 %v626, 2147483648
        %v692 = vmul.f32 %v660, 1.442695
        %v693 = vpow.pop %v692
        %v694 = vmul.f32 %v661, 1.442695
        %v695 = vpow.pop %v694
        %v696 = vmul.f32 %v662, 1.442695
        %v697 = vpow.pop %v696
        %v698 = vmul.f32 %v663, 1.442695
        %v699 = vpow.pop %v698
        %v700 = vmul.f32 %v664, 1.442695
        %v701 = vpow.pop %v700
        %v702 = vmul.f32 %v665, 1.442695
        %v703 = vpow.pop %v702
        %v704 = vmul.f32 %v666, 1.442695
        %v705 = vpow.pop %v704
        %v706 = vmul.f32 %v667, 1.442695
        %v707 = vpow.pop %v706
        %v708 = vmul.f32 %v668, 1.442695
        %v709 = vpow.pop %v708
        %v710 = vmul.f32 %v669, 1.442695
        %v711 = vpow.pop %v710
        %v712 = vmul.f32 %v670, 1.442695
        %v713 = vpow.pop %v712
        %v714 = vmul.f32 %v671, 1.442695
        %v715 = vpow.pop %v714
        %v716 = vmul.f32 %v672, 1.442695
        %v717 = vpow.pop %v716
        %v718 = vmul.f32 %v673, 1.442695
        %v719 = vpow.pop %v718
        %v720 = vmul.f32 %v674, 1.442695
        %v721 = vpow.pop %v720
        %v722 = vmul.f32 %v675, 1.442695
        %v723 = vpow.pop %v722
        %v724 = vmul.f32 %v676, 1.442695
        %v725 = vpow.pop %v724
        %v726 = vmul.f32 %v677, 1.442695
        %v727 = vpow.pop %v726
        %v728 = vmul.f32 %v678, 1.442695
        %v729 = vpow.pop %v728
        %v730 = vmul.f32 %v679, 1.442695
        %v731 = vpow.pop %v730
        %v732 = vmul.f32 %v680, 1.442695
        %v733 = vpow.pop %v732
        %v734 = vmul.f32 %v681, 1.442695
        %v735 = vpow.pop %v734
        %v736 = vmul.f32 %v682, 1.442695
        %v737 = vpow.pop %v736
        %v738 = vmul.f32 %v683, 1.442695
        %v739 = vpow.pop %v738
        %v740 = vmul.f32 %v684, 1.442695
        %v741 = vpow.pop %v740
        %v742 = vmul.f32 %v685, 1.442695
        %v743 = vpow.pop %v742
        %v744 = vmul.f32 %v686, 1.442695
        %v745 = vpow.pop %v744
        %v746 = vmul.f32 %v687, 1.442695
        %v747 = vpow.pop %v746
        %v748 = vmul.f32 %v688, 1.442695
        %v749 = vpow.pop %v748
        %v750 = vmul.f32 %v689, 1.442695
        %v751 = vpow.pop %v750
        %v752 = vmul.f32 %v690, 1.442695
        %v753 = vpow.pop %v752
        %v754 = vmul.f32 %v691, 1.442695
        %v755 = vpow.pop %v754
        %v756 = vadd.f32 %v693, 1.0
        %v757 = vadd.f32 %v695, 1.0
        %v758 = vadd.f32 %v697, 1.0
        %v759 = vadd.f32 %v699, 1.0
        %v760 = vadd.f32 %v701, 1.0
        %v761 = vadd.f32 %v703, 1.0
        %v762 = vadd.f32 %v705, 1.0
        %v763 = vadd.f32 %v707, 1.0
        %v764 = vadd.f32 %v709, 1.0
        %v765 = vadd.f32 %v711, 1.0
        %v766 = vadd.f32 %v713, 1.0
        %v767 = vadd.f32 %v715, 1.0
        %v768 = vadd.f32 %v717, 1.0
        %v769 = vadd.f32 %v719, 1.0
        %v770 = vadd.f32 %v721, 1.0
        %v771 = vadd.f32 %v723, 1.0
        %v772 = vadd.f32 %v725, 1.0
        %v773 = vadd.f32 %v727, 1.0
        %v774 = vadd.f32 %v729, 1.0
        %v775 = vadd.f32 %v731, 1.0
        %v776 = vadd.f32 %v733, 1.0
        %v777 = vadd.f32 %v735, 1.0
        %v778 = vadd.f32 %v737, 1.0
        %v779 = vadd.f32 %v739, 1.0
        %v780 = vadd.f32 %v741, 1.0
        %v781 = vadd.f32 %v743, 1.0
        %v782 = vadd.f32 %v745, 1.0
        %v783 = vadd.f32 %v747, 1.0
        %v784 = vadd.f32 %v749, 1.0
        %v785 = vadd.f32 %v751, 1.0
        %v786 = vadd.f32 %v753, 1.0
        %v787 = vadd.f32 %v755, 1.0
        %v788 = vrcp.pop %v756
        %v789 = vmul.f32 %v756, %v788
        %v790 = vsub.f32 1.0, %v789
        %v791 = vmul.f32 %v788, %v790
        %v792 = vadd.f32 %v788, %v791
        %vm793 = vweird.f32 %v756
        %vm794 = vweird.f32 %v788
        %vm795 = vmor %vm793, %vm794
        %v796 = vsel %vm795, %v788, %v792
        %v797 = vand.u32 2147483647, %v756
        %vm798 = vcmp.eq.f32.partialorder %v797, 8.507059e+37
        %v799 = vand.u32 %v756, 2147483648
        %v800 = vor.u32 1.1754944e-38, %v799
        %v801 = vsel %vm798, %v800, %v796
        %v802 = vmul.f32 1.0, %v801
        %v803 = vrcp.pop %v757
        %v804 = vmul.f32 %v757, %v803
        %v805 = vsub.f32 1.0, %v804
        %v806 = vmul.f32 %v803, %v805
        %v807 = vadd.f32 %v803, %v806
        %vm808 = vweird.f32 %v757
        %vm809 = vweird.f32 %v803
        %vm810 = vmor %vm808, %vm809
        %v811 = vsel %vm810, %v803, %v807
        %v812 = vand.u32 2147483647, %v757
        %vm813 = vcmp.eq.f32.partialorder %v812, 8.507059e+37
        %v814 = vand.u32 %v757, 2147483648
        %v815 = vor.u32 1.1754944e-38, %v814
        %v816 = vsel %vm813, %v815, %v811
        %v817 = vmul.f32 1.0, %v816
        %v818 = vrcp.pop %v758
        %v819 = vmul.f32 %v758, %v818
        %v820 = vsub.f32 1.0, %v819
        %v821 = vmul.f32 %v818, %v820
        %v822 = vadd.f32 %v818, %v821
        %vm823 = vweird.f32 %v758
        %vm824 = vweird.f32 %v818
        %vm825 = vmor %vm823, %vm824
        %v826 = vsel %vm825, %v818, %v822
        %v827 = vand.u32 2147483647, %v758
        %vm828 = vcmp.eq.f32.partialorder %v827, 8.507059e+37
        %v829 = vand.u32 %v758, 2147483648
        %v830 = vor.u32 1.1754944e-38, %v829
        %v831 = vsel %vm828, %v830, %v826
        %v832 = vmul.f32 1.0, %v831
        %v833 = vrcp.pop %v759
        %v834 = vmul.f32 %v759, %v833
        %v835 = vsub.f32 1.0, %v834
        %v836 = vmul.f32 %v833, %v835
        %v837 = vadd.f32 %v833, %v836
        %vm838 = vweird.f32 %v759
        %vm839 = vweird.f32 %v833
        %vm840 = vmor %vm838, %vm839
        %v841 = vsel %vm840, %v833, %v837
        %v842 = vand.u32 2147483647, %v759
        %vm843 = vcmp.eq.f32.partialorder %v842, 8.507059e+37
        %v844 = vand.u32 %v759, 2147483648
        %v845 = vor.u32 1.1754944e-38, %v844
        %v846 = vsel %vm843, %v845, %v841
        %v847 = vmul.f32 1.0, %v846
        %v848 = vrcp.pop %v760
        %v849 = vmul.f32 %v760, %v848
        %v850 = vsub.f32 1.0, %v849
        %v851 = vmul.f32 %v848, %v850
        %v852 = vadd.f32 %v848, %v851
        %vm853 = vweird.f32 %v760
        %vm854 = vweird.f32 %v848
        %vm855 = vmor %vm853, %vm854
        %v856 = vsel %vm855, %v848, %v852
        %v857 = vand.u32 2147483647, %v760
        %vm858 = vcmp.eq.f32.partialorder %v857, 8.507059e+37
        %v859 = vand.u32 %v760, 2147483648
        %v860 = vor.u32 1.1754944e-38, %v859
        %v861 = vsel %vm858, %v860, %v856
        %v862 = vmul.f32 1.0, %v861
        %v863 = vrcp.pop %v761
        %v864 = vmul.f32 %v761, %v863
        %v865 = vsub.f32 1.0, %v864
        %v866 = vmul.f32 %v863, %v865
        %v867 = vadd.f32 %v863, %v866
        %vm868 = vweird.f32 %v761
        %vm869 = vweird.f32 %v863
        %vm870 = vmor %vm868, %vm869
        %v871 = vsel %vm870, %v863, %v867
        %v872 = vand.u32 2147483647, %v761
        %vm873 = vcmp.eq.f32.partialorder %v872, 8.507059e+37
        %v874 = vand.u32 %v761, 2147483648
        %v875 = vor.u32 1.1754944e-38, %v874
        %v876 = vsel %vm873, %v875, %v871
        %v877 = vmul.f32 1.0, %v876
        %v878 = vrcp.pop %v762
        %v879 = vmul.f32 %v762, %v878
        %v880 = vsub.f32 1.0, %v879
        %v881 = vmul.f32 %v878, %v880
        %v882 = vadd.f32 %v878, %v881
        %vm883 = vweird.f32 %v762
        %vm884 = vweird.f32 %v878
        %vm885 = vmor %vm883, %vm884
        %v886 = vsel %vm885, %v878, %v882
        %v887 = vand.u32 2147483647, %v762
        %vm888 = vcmp.eq.f32.partialorder %v887, 8.507059e+37
        %v889 = vand.u32 %v762, 2147483648
        %v890 = vor.u32 1.1754944e-38, %v889
        %v891 = vsel %vm888, %v890, %v886
        %v892 = vmul.f32 1.0, %v891
        %v893 = vrcp.pop %v763
        %v894 = vmul.f32 %v763, %v893
        %v895 = vsub.f32 1.0, %v894
        %v896 = vmul.f32 %v893, %v895
        %v897 = vadd.f32 %v893, %v896
        %vm898 = vweird.f32 %v763
        %vm899 = vweird.f32 %v893
        %vm900 = vmor %vm898, %vm899
        %v901 = vsel %vm900, %v893, %v897
        %v902 = vand.u32 2147483647, %v763
        %vm903 = vcmp.eq.f32.partialorder %v902, 8.507059e+37
        %v904 = vand.u32 %v763, 2147483648
        %v905 = vor.u32 1.1754944e-38, %v904
        %v906 = vsel %vm903, %v905, %v901
        %v907 = vmul.f32 1.0, %v906
        %v908 = vrcp.pop %v764
        %v909 = vmul.f32 %v764, %v908
        %v910 = vsub.f32 1.0, %v909
        %v911 = vmul.f32 %v908, %v910
        %v912 = vadd.f32 %v908, %v911
        %vm913 = vweird.f32 %v764
        %vm914 = vweird.f32 %v908
        %vm915 = vmor %vm913, %vm914
        %v916 = vsel %vm915, %v908, %v912
        %v917 = vand.u32 2147483647, %v764
        %vm918 = vcmp.eq.f32.partialorder %v917, 8.507059e+37
        %v919 = vand.u32 %v764, 2147483648
        %v920 = vor.u32 1.1754944e-38, %v919
        %v921 = vsel %vm918, %v920, %v916
        %v922 = vmul.f32 1.0, %v921
        %v923 = vrcp.pop %v765
        %v924 = vmul.f32 %v765, %v923
        %v925 = vsub.f32 1.0, %v924
        %v926 = vmul.f32 %v923, %v925
        %v927 = vadd.f32 %v923, %v926
        %vm928 = vweird.f32 %v765
        %vm929 = vweird.f32 %v923
        %vm930 = vmor %vm928, %vm929
        %v931 = vsel %vm930, %v923, %v927
        %v932 = vand.u32 2147483647, %v765
        %vm933 = vcmp.eq.f32.partialorder %v932, 8.507059e+37
        %v934 = vand.u32 %v765, 2147483648
        %v935 = vor.u32 1.1754944e-38, %v934
        %v936 = vsel %vm933, %v935, %v931
        %v937 = vmul.f32 1.0, %v936
        %v938 = vrcp.pop %v766
        %v939 = vmul.f32 %v766, %v938
        %v940 = vsub.f32 1.0, %v939
        %v941 = vmul.f32 %v938, %v940
        %v942 = vadd.f32 %v938, %v941
        %vm943 = vweird.f32 %v766
        %vm944 = vweird.f32 %v938
        %vm945 = vmor %vm943, %vm944
        %v946 = vsel %vm945, %v938, %v942
        %v947 = vand.u32 2147483647, %v766
        %vm948 = vcmp.eq.f32.partialorder %v947, 8.507059e+37
        %v949 = vand.u32 %v766, 2147483648
        %v950 = vor.u32 1.1754944e-38, %v949
        %v951 = vsel %vm948, %v950, %v946
        %v952 = vmul.f32 1.0, %v951
        %v953 = vrcp.pop %v767
        %v954 = vmul.f32 %v767, %v953
        %v955 = vsub.f32 1.0, %v954
        %v956 = vmul.f32 %v953, %v955
        %v957 = vadd.f32 %v953, %v956
        %vm958 = vweird.f32 %v767
        %vm959 = vweird.f32 %v953
        %vm960 = vmor %vm958, %vm959
        %v961 = vsel %vm960, %v953, %v957
        %v962 = vand.u32 2147483647, %v767
        %vm963 = vcmp.eq.f32.partialorder %v962, 8.507059e+37
        %v964 = vand.u32 %v767, 2147483648
        %v965 = vor.u32 1.1754944e-38, %v964
        %v966 = vsel %vm963, %v965, %v961
        %v967 = vmul.f32 1.0, %v966
        %v968 = vrcp.pop %v768
        %v969 = vmul.f32 %v768, %v968
        %v970 = vsub.f32 1.0, %v969
        %v971 = vmul.f32 %v968, %v970
        %v972 = vadd.f32 %v968, %v971
        %vm973 = vweird.f32 %v768
        %vm974 = vweird.f32 %v968
        %vm975 = vmor %vm973, %vm974
        %v976 = vsel %vm975, %v968, %v972
        %v977 = vand.u32 2147483647, %v768
        %vm978 = vcmp.eq.f32.partialorder %v977, 8.507059e+37
        %v979 = vand.u32 %v768, 2147483648
        %v980 = vor.u32 1.1754944e-38, %v979
        %v981 = vsel %vm978, %v980, %v976
        %v982 = vmul.f32 1.0, %v981
        %v983 = vrcp.pop %v769
        %v984 = vmul.f32 %v769, %v983
        %v985 = vsub.f32 1.0, %v984
        %v986 = vmul.f32 %v983, %v985
        %v987 = vadd.f32 %v983, %v986
        %vm988 = vweird.f32 %v769
        %vm989 = vweird.f32 %v983
        %vm990 = vmor %vm988, %vm989
        %v991 = vsel %vm990, %v983, %v987
        %v992 = vand.u32 2147483647, %v769
        %vm993 = vcmp.eq.f32.partialorder %v992, 8.507059e+37
        %v994 = vand.u32 %v769, 2147483648
        %v995 = vor.u32 1.1754944e-38, %v994
        %v996 = vsel %vm993, %v995, %v991
        %v997 = vmul.f32 1.0, %v996
        %v998 = vrcp.pop %v770
        %v999 = vmul.f32 %v770, %v998
        %v1000 = vsub.f32 1.0, %v999
        %v1001 = vmul.f32 %v998, %v1000
        %v1002 = vadd.f32 %v998, %v1001
        %vm1003 = vweird.f32 %v770
        %vm1004 = vweird.f32 %v998
        %vm1005 = vmor %vm1003, %vm1004
        %v1006 = vsel %vm1005, %v998, %v1002
        %v1007 = vand.u32 2147483647, %v770
        %vm1008 = vcmp.eq.f32.partialorder %v1007, 8.507059e+37
        %v1009 = vand.u32 %v770, 2147483648
        %v1010 = vor.u32 1.1754944e-38, %v1009
        %v1011 = vsel %vm1008, %v1010, %v1006
        %v1012 = vmul.f32 1.0, %v1011
        %v1013 = vrcp.pop %v771
        %v1014 = vmul.f32 %v771, %v1013
        %v1015 = vsub.f32 1.0, %v1014
        %v1016 = vmul.f32 %v1013, %v1015
        %v1017 = vadd.f32 %v1013, %v1016
        %vm1018 = vweird.f32 %v771
        %vm1019 = vweird.f32 %v1013
        %vm1020 = vmor %vm1018, %vm1019
        %v1021 = vsel %vm1020, %v1013, %v1017
        %v1022 = vand.u32 2147483647, %v771
        %vm1023 = vcmp.eq.f32.partialorder %v1022, 8.507059e+37
        %v1024 = vand.u32 %v771, 2147483648
        %v1025 = vor.u32 1.1754944e-38, %v1024
        %v1026 = vsel %vm1023, %v1025, %v1021
        %v1027 = vmul.f32 1.0, %v1026
        %v1028 = vrcp.pop %v772
        %v1029 = vmul.f32 %v772, %v1028
        %v1030 = vsub.f32 1.0, %v1029
        %v1031 = vmul.f32 %v1028, %v1030
        %v1032 = vadd.f32 %v1028, %v1031
        %vm1033 = vweird.f32 %v772
        %vm1034 = vweird.f32 %v1028
        %vm1035 = vmor %vm1033, %vm1034
        %v1036 = vsel %vm1035, %v1028, %v1032
        %v1037 = vand.u32 2147483647, %v772
        %vm1038 = vcmp.eq.f32.partialorder %v1037, 8.507059e+37
        %v1039 = vand.u32 %v772, 2147483648
        %v1040 = vor.u32 1.1754944e-38, %v1039
        %v1041 = vsel %vm1038, %v1040, %v1036
        %v1042 = vmul.f32 1.0, %v1041
        %v1043 = vrcp.pop %v773
        %v1044 = vmul.f32 %v773, %v1043
        %v1045 = vsub.f32 1.0, %v1044
        %v1046 = vmul.f32 %v1043, %v1045
        %v1047 = vadd.f32 %v1043, %v1046
        %vm1048 = vweird.f32 %v773
        %vm1049 = vweird.f32 %v1043
        %vm1050 = vmor %vm1048, %vm1049
        %v1051 = vsel %vm1050, %v1043, %v1047
        %v1052 = vand.u32 2147483647, %v773
        %vm1053 = vcmp.eq.f32.partialorder %v1052, 8.507059e+37
        %v1054 = vand.u32 %v773, 2147483648
        %v1055 = vor.u32 1.1754944e-38, %v1054
        %v1056 = vsel %vm1053, %v1055, %v1051
        %v1057 = vmul.f32 1.0, %v1056
        %v1058 = vrcp.pop %v774
        %v1059 = vmul.f32 %v774, %v1058
        %v1060 = vsub.f32 1.0, %v1059
        %v1061 = vmul.f32 %v1058, %v1060
        %v1062 = vadd.f32 %v1058, %v1061
        %vm1063 = vweird.f32 %v774
        %vm1064 = vweird.f32 %v1058
        %vm1065 = vmor %vm1063, %vm1064
        %v1066 = vsel %vm1065, %v1058, %v1062
        %v1067 = vand.u32 2147483647, %v774
        %vm1068 = vcmp.eq.f32.partialorder %v1067, 8.507059e+37
        %v1069 = vand.u32 %v774, 2147483648
        %v1070 = vor.u32 1.1754944e-38, %v1069
        %v1071 = vsel %vm1068, %v1070, %v1066
        %v1072 = vmul.f32 1.0, %v1071
        %v1073 = vrcp.pop %v775
        %v1074 = vmul.f32 %v775, %v1073
        %v1075 = vsub.f32 1.0, %v1074
        %v1076 = vmul.f32 %v1073, %v1075
        %v1077 = vadd.f32 %v1073, %v1076
        %vm1078 = vweird.f32 %v775
        %vm1079 = vweird.f32 %v1073
        %vm1080 = vmor %vm1078, %vm1079
        %v1081 = vsel %vm1080, %v1073, %v1077
        %v1082 = vand.u32 2147483647, %v775
        %vm1083 = vcmp.eq.f32.partialorder %v1082, 8.507059e+37
        %v1084 = vand.u32 %v775, 2147483648
        %v1085 = vor.u32 1.1754944e-38, %v1084
        %v1086 = vsel %vm1083, %v1085, %v1081
        %v1087 = vmul.f32 1.0, %v1086
        %v1088 = vrcp.pop %v776
        %v1089 = vmul.f32 %v776, %v1088
        %v1090 = vsub.f32 1.0, %v1089
        %v1091 = vmul.f32 %v1088, %v1090
        %v1092 = vadd.f32 %v1088, %v1091
        %vm1093 = vweird.f32 %v776
        %vm1094 = vweird.f32 %v1088
        %vm1095 = vmor %vm1093, %vm1094
        %v1096 = vsel %vm1095, %v1088, %v1092
        %v1097 = vand.u32 2147483647, %v776
        %vm1098 = vcmp.eq.f32.partialorder %v1097, 8.507059e+37
        %v1099 = vand.u32 %v776, 2147483648
        %v1100 = vor.u32 1.1754944e-38, %v1099
        %v1101 = vsel %vm1098, %v1100, %v1096
        %v1102 = vmul.f32 1.0, %v1101
        %v1103 = vrcp.pop %v777
        %v1104 = vmul.f32 %v777, %v1103
        %v1105 = vsub.f32 1.0, %v1104
        %v1106 = vmul.f32 %v1103, %v1105
        %v1107 = vadd.f32 %v1103, %v1106
        %vm1108 = vweird.f32 %v777
        %vm1109 = vweird.f32 %v1103
        %vm1110 = vmor %vm1108, %vm1109
        %v1111 = vsel %vm1110, %v1103, %v1107
        %v1112 = vand.u32 2147483647, %v777
        %vm1113 = vcmp.eq.f32.partialorder %v1112, 8.507059e+37
        %v1114 = vand.u32 %v777, 2147483648
        %v1115 = vor.u32 1.1754944e-38, %v1114
        %v1116 = vsel %vm1113, %v1115, %v1111
        %v1117 = vmul.f32 1.0, %v1116
        %v1118 = vrcp.pop %v778
        %v1119 = vmul.f32 %v778, %v1118
        %v1120 = vsub.f32 1.0, %v1119
        %v1121 = vmul.f32 %v1118, %v1120
        %v1122 = vadd.f32 %v1118, %v1121
        %vm1123 = vweird.f32 %v778
        %vm1124 = vweird.f32 %v1118
        %vm1125 = vmor %vm1123, %vm1124
        %v1126 = vsel %vm1125, %v1118, %v1122
        %v1127 = vand.u32 2147483647, %v778
        %vm1128 = vcmp.eq.f32.partialorder %v1127, 8.507059e+37
        %v1129 = vand.u32 %v778, 2147483648
        %v1130 = vor.u32 1.1754944e-38, %v1129
        %v1131 = vsel %vm1128, %v1130, %v1126
        %v1132 = vmul.f32 1.0, %v1131
        %v1133 = vrcp.pop %v779
        %v1134 = vmul.f32 %v779, %v1133
        %v1135 = vsub.f32 1.0, %v1134
        %v1136 = vmul.f32 %v1133, %v1135
        %v1137 = vadd.f32 %v1133, %v1136
        %vm1138 = vweird.f32 %v779
        %vm1139 = vweird.f32 %v1133
        %vm1140 = vmor %vm1138, %vm1139
        %v1141 = vsel %vm1140, %v1133, %v1137
        %v1142 = vand.u32 2147483647, %v779
        %vm1143 = vcmp.eq.f32.partialorder %v1142, 8.507059e+37
        %v1144 = vand.u32 %v779, 2147483648
        %v1145 = vor.u32 1.1754944e-38, %v1144
        %v1146 = vsel %vm1143, %v1145, %v1141
        %v1147 = vmul.f32 1.0, %v1146
        %v1148 = vrcp.pop %v780
        %v1149 = vmul.f32 %v780, %v1148
        %v1150 = vsub.f32 1.0, %v1149
        %v1151 = vmul.f32 %v1148, %v1150
        %v1152 = vadd.f32 %v1148, %v1151
        %vm1153 = vweird.f32 %v780
        %vm1154 = vweird.f32 %v1148
        %vm1155 = vmor %vm1153, %vm1154
        %v1156 = vsel %vm1155, %v1148, %v1152
        %v1157 = vand.u32 2147483647, %v780
        %vm1158 = vcmp.eq.f32.partialorder %v1157, 8.507059e+37
        %v1159 = vand.u32 %v780, 2147483648
        %v1160 = vor.u32 1.1754944e-38, %v1159
        %v1161 = vsel %vm1158, %v1160, %v1156
        %v1162 = vmul.f32 1.0, %v1161
        %v1163 = vrcp.pop %v781
        %v1164 = vmul.f32 %v781, %v1163
        %v1165 = vsub.f32 1.0, %v1164
        %v1166 = vmul.f32 %v1163, %v1165
        %v1167 = vadd.f32 %v1163, %v1166
        %vm1168 = vweird.f32 %v781
        %vm1169 = vweird.f32 %v1163
        %vm1170 = vmor %vm1168, %vm1169
        %v1171 = vsel %vm1170, %v1163, %v1167
        %v1172 = vand.u32 2147483647, %v781
        %vm1173 = vcmp.eq.f32.partialorder %v1172, 8.507059e+37
        %v1174 = vand.u32 %v781, 2147483648
        %v1175 = vor.u32 1.1754944e-38, %v1174
        %v1176 = vsel %vm1173, %v1175, %v1171
        %v1177 = vmul.f32 1.0, %v1176
        %v1178 = vrcp.pop %v782
        %v1179 = vmul.f32 %v782, %v1178
        %v1180 = vsub.f32 1.0, %v1179
        %v1181 = vmul.f32 %v1178, %v1180
        %v1182 = vadd.f32 %v1178, %v1181
        %vm1183 = vweird.f32 %v782
        %vm1184 = vweird.f32 %v1178
        %vm1185 = vmor %vm1183, %vm1184
        %v1186 = vsel %vm1185, %v1178, %v1182
        %v1187 = vand.u32 2147483647, %v782
        %vm1188 = vcmp.eq.f32.partialorder %v1187, 8.507059e+37
        %v1189 = vand.u32 %v782, 2147483648
        %v1190 = vor.u32 1.1754944e-38, %v1189
        %v1191 = vsel %vm1188, %v1190, %v1186
        %v1192 = vmul.f32 1.0, %v1191
        %v1193 = vrcp.pop %v783
        %v1194 = vmul.f32 %v783, %v1193
        %v1195 = vsub.f32 1.0, %v1194
        %v1196 = vmul.f32 %v1193, %v1195
        %v1197 = vadd.f32 %v1193, %v1196
        %vm1198 = vweird.f32 %v783
        %vm1199 = vweird.f32 %v1193
        %vm1200 = vmor %vm1198, %vm1199
        %v1201 = vsel %vm1200, %v1193, %v1197
        %v1202 = vand.u32 2147483647, %v783
        %vm1203 = vcmp.eq.f32.partialorder %v1202, 8.507059e+37
        %v1204 = vand.u32 %v783, 2147483648
        %v1205 = vor.u32 1.1754944e-38, %v1204
        %v1206 = vsel %vm1203, %v1205, %v1201
        %v1207 = vmul.f32 1.0, %v1206
        %v1208 = vrcp.pop %v784
        %v1209 = vmul.f32 %v784, %v1208
        %v1210 = vsub.f32 1.0, %v1209
        %v1211 = vmul.f32 %v1208, %v1210
        %v1212 = vadd.f32 %v1208, %v1211
        %vm1213 = vweird.f32 %v784
        %vm1214 = vweird.f32 %v1208
        %vm1215 = vmor %vm1213, %vm1214
        %v1216 = vsel %vm1215, %v1208, %v1212
        %v1217 = vand.u32 2147483647, %v784
        %vm1218 = vcmp.eq.f32.partialorder %v1217, 8.507059e+37
        %v1219 = vand.u32 %v784, 2147483648
        %v1220 = vor.u32 1.1754944e-38, %v1219
        %v1221 = vsel %vm1218, %v1220, %v1216
        %v1222 = vmul.f32 1.0, %v1221
        %v1223 = vrcp.pop %v785
        %v1224 = vmul.f32 %v785, %v1223
        %v1225 = vsub.f32 1.0, %v1224
        %v1226 = vmul.f32 %v1223, %v1225
        %v1227 = vadd.f32 %v1223, %v1226
        %vm1228 = vweird.f32 %v785
        %vm1229 = vweird.f32 %v1223
        %vm1230 = vmor %vm1228, %vm1229
        %v1231 = vsel %vm1230, %v1223, %v1227
        %v1232 = vand.u32 2147483647, %v785
        %vm1233 = vcmp.eq.f32.partialorder %v1232, 8.507059e+37
        %v1234 = vand.u32 %v785, 2147483648
        %v1235 = vor.u32 1.1754944e-38, %v1234
        %v1236 = vsel %vm1233, %v1235, %v1231
        %v1237 = vmul.f32 1.0, %v1236
        %v1238 = vrcp.pop %v786
        %v1239 = vmul.f32 %v786, %v1238
        %v1240 = vsub.f32 1.0, %v1239
        %v1241 = vmul.f32 %v1238, %v1240
        %v1242 = vadd.f32 %v1238, %v1241
        %vm1243 = vweird.f32 %v786
        %vm1244 = vweird.f32 %v1238
        %vm1245 = vmor %vm1243, %vm1244
        %v1246 = vsel %vm1245, %v1238, %v1242
        %v1247 = vand.u32 2147483647, %v786
        %vm1248 = vcmp.eq.f32.partialorder %v1247, 8.507059e+37
        %v1249 = vand.u32 %v786, 2147483648
        %v1250 = vor.u32 1.1754944e-38, %v1249
        %v1251 = vsel %vm1248, %v1250, %v1246
        %v1252 = vmul.f32 1.0, %v1251
        %v1253 = vrcp.pop %v787
        %v1254 = vmul.f32 %v787, %v1253
        %v1255 = vsub.f32 1.0, %v1254
        %v1256 = vmul.f32 %v1253, %v1255
        %v1257 = vadd.f32 %v1253, %v1256
        %vm1258 = vweird.f32 %v787
        %vm1259 = vweird.f32 %v1253
        %vm1260 = vmor %vm1258, %vm1259
        %v1261 = vsel %vm1260, %v1253, %v1257
        %v1262 = vand.u32 2147483647, %v787
        %vm1263 = vcmp.eq.f32.partialorder %v1262, 8.507059e+37
        %v1264 = vand.u32 %v787, 2147483648
        %v1265 = vor.u32 1.1754944e-38, %v1264
        %v1266 = vsel %vm1263, %v1265, %v1261
        %v1267 = vmul.f32 1.0, %v1266
        %v1268 = vlaneseq
        %v1269 = vshrl.u32 %v1268, 7
        %v1270 = vadd.s32 %v1269, 8
        %v1271 = vadd.s32 %v1269, 16
        %v1272 = vadd.s32 %v1269, 24
        %v1273 = vadd.s32 %v1269, 32
        %v1274 = vadd.s32 %v1269, 40
        %v1275 = vadd.s32 %v1269, 48
        %v1276 = vadd.s32 %v1269, 56
        %v1277 = vadd.s32 %v1269, 64
        %v1278 = vadd.s32 %v1269, 72
        %v1279 = vadd.s32 %v1269, 80
        %v1280 = vadd.s32 %v1269, 88
        %v1281 = vadd.s32 %v1269, 96
        %v1282 = vadd.s32 %v1269, 104
        %v1283 = vadd.s32 %v1269, 112
        %v1284 = vadd.s32 %v1269, 120
        %v1285 = vadd.s32 %v1269, 128
        %v1286 = vadd.s32 %v1269, 136
        %v1287 = vadd.s32 %v1269, 144
        %v1288 = vadd.s32 %v1269, 152
        %v1289 = vadd.s32 %v1269, 160
        %v1290 = vadd.s32 %v1269, 168
        %v1291 = vadd.s32 %v1269, 176
        %v1292 = vadd.s32 %v1269, 184
        %v1293 = vadd.s32 %v1269, 192
        %v1294 = vadd.s32 %v1269, 200
        %v1295 = vadd.s32 %v1269, 208
        %v1296 = vadd.s32 %v1269, 216
        %v1297 = vadd.s32 %v1269, 224
        %v1298 = vadd.s32 %v1269, 232
        %v1299 = vadd.s32 %v1269, 240
        %v1300 = vadd.s32 %v1269, 248
        %s1301 = sld [smem:[#allocation4 + %s55]]
        %v1302 = vstv %s1301
        %v1303 = vadd.s32 %v1269, %v1302
        %v1304 = vadd.s32 %v1270, %v1302
        %v1305 = vadd.s32 %v1271, %v1302
        %v1306 = vadd.s32 %v1272, %v1302
        %v1307 = vadd.s32 %v1273, %v1302
        %v1308 = vadd.s32 %v1274, %v1302
        %v1309 = vadd.s32 %v1275, %v1302
        %v1310 = vadd.s32 %v1276, %v1302
        %v1311 = vadd.s32 %v1277, %v1302
        %v1312 = vadd.s32 %v1278, %v1302
        %v1313 = vadd.s32 %v1279, %v1302
        %v1314 = vadd.s32 %v1280, %v1302
        %v1315 = vadd.s32 %v1281, %v1302
        %v1316 = vadd.s32 %v1282, %v1302
        %v1317 = vadd.s32 %v1283, %v1302
        %v1318 = vadd.s32 %v1284, %v1302
        %v1319 = vadd.s32 %v1285, %v1302
        %v1320 = vadd.s32 %v1286, %v1302
        %v1321 = vadd.s32 %v1287, %v1302
        %v1322 = vadd.s32 %v1288, %v1302
        %v1323 = vadd.s32 %v1289, %v1302
        %v1324 = vadd.s32 %v1290, %v1302
        %v1325 = vadd.s32 %v1291, %v1302
        %v1326 = vadd.s32 %v1292, %v1302
        %v1327 = vadd.s32 %v1293, %v1302
        %v1328 = vadd.s32 %v1294, %v1302
        %v1329 = vadd.s32 %v1295, %v1302
        %v1330 = vadd.s32 %v1296, %v1302
        %v1331 = vadd.s32 %v1297, %v1302
        %v1332 = vadd.s32 %v1298, %v1302
        %v1333 = vadd.s32 %v1299, %v1302
        %v1334 = vadd.s32 %v1300, %v1302
        %v1335 = vcvt.s32.f32 %v1303
        %v1336 = vcvt.s32.f32 %v1304
        %v1337 = vcvt.s32.f32 %v1305
        %v1338 = vcvt.s32.f32 %v1306
        %v1339 = vcvt.s32.f32 %v1307
        %v1340 = vcvt.s32.f32 %v1308
        %v1341 = vcvt.s32.f32 %v1309
        %v1342 = vcvt.s32.f32 %v1310
        %v1343 = vcvt.s32.f32 %v1311
        %v1344 = vcvt.s32.f32 %v1312
        %v1345 = vcvt.s32.f32 %v1313
        %v1346 = vcvt.s32.f32 %v1314
        %v1347 = vcvt.s32.f32 %v1315
        %v1348 = vcvt.s32.f32 %v1316
        %v1349 = vcvt.s32.f32 %v1317
        %v1350 = vcvt.s32.f32 %v1318
        %v1351 = vcvt.s32.f32 %v1319
        %v1352 = vcvt.s32.f32 %v1320
        %v1353 = vcvt.s32.f32 %v1321
        %v1354 = vcvt.s32.f32 %v1322
        %v1355 = vcvt.s32.f32 %v1323
        %v1356 = vcvt.s32.f32 %v1324
        %v1357 = vcvt.s32.f32 %v1325
        %v1358 = vcvt.s32.f32 %v1326
        %v1359 = vcvt.s32.f32 %v1327
        %v1360 = vcvt.s32.f32 %v1328
        %v1361 = vcvt.s32.f32 %v1329
        %v1362 = vcvt.s32.f32 %v1330
        %v1363 = vcvt.s32.f32 %v1331
        %v1364 = vcvt.s32.f32 %v1332
        %v1365 = vcvt.s32.f32 %v1333
        %v1366 = vcvt.s32.f32 %v1334
        %s1367 = sld [smem:[#allocation5 + %s55]]
        %v1368 = vstv %s1367
        %v1369 = vcvt.s32.f32 %v1368
        %s1370 = sld [smem:[#allocation6 + %s55]]
        %v1371 = vstv %s1370
        %v1372 = vcvt.s32.f32 %v1371
        %v1373 = vadd.f32 %v1335, 0.5
        %v1374 = vadd.f32 %v1336, 0.5
        %v1375 = vadd.f32 %v1337, 0.5
        %v1376 = vadd.f32 %v1338, 0.5
        %v1377 = vadd.f32 %v1339, 0.5
        %v1378 = vadd.f32 %v1340, 0.5
        %v1379 = vadd.f32 %v1341, 0.5
        %v1380 = vadd.f32 %v1342, 0.5
        %v1381 = vadd.f32 %v1343, 0.5
        %v1382 = vadd.f32 %v1344, 0.5
        %v1383 = vadd.f32 %v1345, 0.5
        %v1384 = vadd.f32 %v1346, 0.5
        %v1385 = vadd.f32 %v1347, 0.5
        %v1386 = vadd.f32 %v1348, 0.5
        %v1387 = vadd.f32 %v1349, 0.5
        %v1388 = vadd.f32 %v1350, 0.5
        %v1389 = vadd.f32 %v1351, 0.5
        %v1390 = vadd.f32 %v1352, 0.5
        %v1391 = vadd.f32 %v1353, 0.5
        %v1392 = vadd.f32 %v1354, 0.5
        %v1393 = vadd.f32 %v1355, 0.5
        %v1394 = vadd.f32 %v1356, 0.5
        %v1395 = vadd.f32 %v1357, 0.5
        %v1396 = vadd.f32 %v1358, 0.5
        %v1397 = vadd.f32 %v1359, 0.5
        %v1398 = vadd.f32 %v1360, 0.5
        %v1399 = vadd.f32 %v1361, 0.5
        %v1400 = vadd.f32 %v1362, 0.5
        %v1401 = vadd.f32 %v1363, 0.5
        %v1402 = vadd.f32 %v1364, 0.5
        %v1403 = vadd.f32 %v1365, 0.5
        %v1404 = vadd.f32 %v1366, 0.5
        %v1405 = vrcp.pop %v1369
        %v1406 = vmul.f32 %v1369, %v1405
        %v1407 = vsub.f32 1.0, %v1406
        %v1408 = vmul.f32 %v1405, %v1407
        %v1409 = vadd.f32 %v1405, %v1408
        %vm1410 = vweird.f32 %v1369
        %vm1411 = vweird.f32 %v1405
        %vm1412 = vmor %vm1410, %vm1411
        %v1413 = vsel %vm1412, %v1405, %v1409
        %v1414 = vand.u32 2147483647, %v1369
        %vm1415 = vcmp.eq.f32.partialorder %v1414, 8.507059e+37
        %v1416 = vand.u32 %v1369, 2147483648
        %v1417 = vor.u32 1.1754944e-38, %v1416
        %v1418 = vsel %vm1415, %v1417, %v1413
        %v1419 = vmul.f32 %v1373, %v1418
        %v1420 = vmul.f32 %v1374, %v1418
        %v1421 = vmul.f32 %v1375, %v1418
        %v1422 = vmul.f32 %v1376, %v1418
        %v1423 = vmul.f32 %v1377, %v1418
        %v1424 = vmul.f32 %v1378, %v1418
        %v1425 = vmul.f32 %v1379, %v1418
        %v1426 = vmul.f32 %v1380, %v1418
        %v1427 = vmul.f32 %v1381, %v1418
        %v1428 = vmul.f32 %v1382, %v1418
        %v1429 = vmul.f32 %v1383, %v1418
        %v1430 = vmul.f32 %v1384, %v1418
        %v1431 = vmul.f32 %v1385, %v1418
        %v1432 = vmul.f32 %v1386, %v1418
        %v1433 = vmul.f32 %v1387, %v1418
        %v1434 = vmul.f32 %v1388, %v1418
        %v1435 = vmul.f32 %v1389, %v1418
        %v1436 = vmul.f32 %v1390, %v1418
        %v1437 = vmul.f32 %v1391, %v1418
        %v1438 = vmul.f32 %v1392, %v1418
        %v1439 = vmul.f32 %v1393, %v1418
        %v1440 = vmul.f32 %v1394, %v1418
        %v1441 = vmul.f32 %v1395, %v1418
        %v1442 = vmul.f32 %v1396, %v1418
        %v1443 = vmul.f32 %v1397, %v1418
        %v1444 = vmul.f32 %v1398, %v1418
        %v1445 = vmul.f32 %v1399, %v1418
        %v1446 = vmul.f32 %v1400, %v1418
        %v1447 = vmul.f32 %v1401, %v1418
        %v1448 = vmul.f32 %v1402, %v1418
        %v1449 = vmul.f32 %v1403, %v1418
        %v1450 = vmul.f32 %v1404, %v1418
        %v1451 = vfloor.f32 %v1419
        %v1452 = vfloor.f32 %v1420
        %v1453 = vfloor.f32 %v1421
        %v1454 = vfloor.f32 %v1422
        %v1455 = vfloor.f32 %v1423
        %v1456 = vfloor.f32 %v1424
        %v1457 = vfloor.f32 %v1425
        %v1458 = vfloor.f32 %v1426
        %v1459 = vfloor.f32 %v1427
        %v1460 = vfloor.f32 %v1428
        %v1461 = vfloor.f32 %v1429
        %v1462 = vfloor.f32 %v1430
        %v1463 = vfloor.f32 %v1431
        %v1464 = vfloor.f32 %v1432
        %v1465 = vfloor.f32 %v1433
        %v1466 = vfloor.f32 %v1434
        %v1467 = vfloor.f32 %v1435
        %v1468 = vfloor.f32 %v1436
        %v1469 = vfloor.f32 %v1437
        %v1470 = vfloor.f32 %v1438
        %v1471 = vfloor.f32 %v1439
        %v1472 = vfloor.f32 %v1440
        %v1473 = vfloor.f32 %v1441
        %v1474 = vfloor.f32 %v1442
        %v1475 = vfloor.f32 %v1443
        %v1476 = vfloor.f32 %v1444
        %v1477 = vfloor.f32 %v1445
        %v1478 = vfloor.f32 %v1446
        %v1479 = vfloor.f32 %v1447
        %v1480 = vfloor.f32 %v1448
        %v1481 = vfloor.f32 %v1449
        %v1482 = vfloor.f32 %v1450
        %v1483 = vmul.f32 %v1451, %v1369
        %v1484 = vmul.f32 %v1452, %v1369
        %v1485 = vmul.f32 %v1453, %v1369
        %v1486 = vmul.f32 %v1454, %v1369
        %v1487 = vmul.f32 %v1455, %v1369
        %v1488 = vmul.f32 %v1456, %v1369
        %v1489 = vmul.f32 %v1457, %v1369
        %v1490 = vmul.f32 %v1458, %v1369
        %v1491 = vmul.f32 %v1459, %v1369
        %v1492 = vmul.f32 %v1460, %v1369
        %v1493 = vmul.f32 %v1461, %v1369
        %v1494 = vmul.f32 %v1462, %v1369
        %v1495 = vmul.f32 %v1463, %v1369
        %v1496 = vmul.f32 %v1464, %v1369
        %v1497 = vmul.f32 %v1465, %v1369
        %v1498 = vmul.f32 %v1466, %v1369
        %v1499 = vmul.f32 %v1467, %v1369
        %v1500 = vmul.f32 %v1468, %v1369
        %v1501 = vmul.f32 %v1469, %v1369
        %v1502 = vmul.f32 %v1470, %v1369
        %v1503 = vmul.f32 %v1471, %v1369
        %v1504 = vmul.f32 %v1472, %v1369
        %v1505 = vmul.f32 %v1473, %v1369
        %v1506 = vmul.f32 %v1474, %v1369
        %v1507 = vmul.f32 %v1475, %v1369
        %v1508 = vmul.f32 %v1476, %v1369
        %v1509 = vmul.f32 %v1477, %v1369
        %v1510 = vmul.f32 %v1478, %v1369
        %v1511 = vmul.f32 %v1479, %v1369
        %v1512 = vmul.f32 %v1480, %v1369
        %v1513 = vmul.f32 %v1481, %v1369
        %v1514 = vmul.f32 %v1482, %v1369
        %v1515 = vsub.f32 %v1335, %v1483
        %v1516 = vsub.f32 %v1336, %v1484
        %v1517 = vsub.f32 %v1337, %v1485
        %v1518 = vsub.f32 %v1338, %v1486
        %v1519 = vsub.f32 %v1339, %v1487
        %v1520 = vsub.f32 %v1340, %v1488
        %v1521 = vsub.f32 %v1341, %v1489
        %v1522 = vsub.f32 %v1342, %v1490
        %v1523 = vsub.f32 %v1343, %v1491
        %v1524 = vsub.f32 %v1344, %v1492
        %v1525 = vsub.f32 %v1345, %v1493
        %v1526 = vsub.f32 %v1346, %v1494
        %v1527 = vsub.f32 %v1347, %v1495
        %v1528 = vsub.f32 %v1348, %v1496
        %v1529 = vsub.f32 %v1349, %v1497
        %v1530 = vsub.f32 %v1350, %v1498
        %v1531 = vsub.f32 %v1351, %v1499
        %v1532 = vsub.f32 %v1352, %v1500
        %v1533 = vsub.f32 %v1353, %v1501
        %v1534 = vsub.f32 %v1354, %v1502
        %v1535 = vsub.f32 %v1355, %v1503
        %v1536 = vsub.f32 %v1356, %v1504
        %v1537 = vsub.f32 %v1357, %v1505
        %v1538 = vsub.f32 %v1358, %v1506
        %v1539 = vsub.f32 %v1359, %v1507
        %v1540 = vsub.f32 %v1360, %v1508
        %v1541 = vsub.f32 %v1361, %v1509
        %v1542 = vsub.f32 %v1362, %v1510
        %v1543 = vsub.f32 %v1363, %v1511
        %v1544 = vsub.f32 %v1364, %v1512
        %v1545 = vsub.f32 %v1365, %v1513
        %v1546 = vsub.f32 %v1366, %v1514
        %v1547 = vadd.f32 %v1515, 0.5
        %v1548 = vadd.f32 %v1516, 0.5
        %v1549 = vadd.f32 %v1517, 0.5
        %v1550 = vadd.f32 %v1518, 0.5
        %v1551 = vadd.f32 %v1519, 0.5
        %v1552 = vadd.f32 %v1520, 0.5
        %v1553 = vadd.f32 %v1521, 0.5
        %v1554 = vadd.f32 %v1522, 0.5
        %v1555 = vadd.f32 %v1523, 0.5
        %v1556 = vadd.f32 %v1524, 0.5
        %v1557 = vadd.f32 %v1525, 0.5
        %v1558 = vadd.f32 %v1526, 0.5
        %v1559 = vadd.f32 %v1527, 0.5
        %v1560 = vadd.f32 %v1528, 0.5
        %v1561 = vadd.f32 %v1529, 0.5
        %v1562 = vadd.f32 %v1530, 0.5
        %v1563 = vadd.f32 %v1531, 0.5
        %v1564 = vadd.f32 %v1532, 0.5
        %v1565 = vadd.f32 %v1533, 0.5
        %v1566 = vadd.f32 %v1534, 0.5
        %v1567 = vadd.f32 %v1535, 0.5
        %v1568 = vadd.f32 %v1536, 0.5
        %v1569 = vadd.f32 %v1537, 0.5
        %v1570 = vadd.f32 %v1538, 0.5
        %v1571 = vadd.f32 %v1539, 0.5
        %v1572 = vadd.f32 %v1540, 0.5
        %v1573 = vadd.f32 %v1541, 0.5
        %v1574 = vadd.f32 %v1542, 0.5
        %v1575 = vadd.f32 %v1543, 0.5
        %v1576 = vadd.f32 %v1544, 0.5
        %v1577 = vadd.f32 %v1545, 0.5
        %v1578 = vadd.f32 %v1546, 0.5
        %v1579 = vrcp.pop %v1372
        %v1580 = vmul.f32 %v1372, %v1579
        %v1581 = vsub.f32 1.0, %v1580
        %v1582 = vmul.f32 %v1579, %v1581
        %v1583 = vadd.f32 %v1579, %v1582
        %vm1584 = vweird.f32 %v1372
        %vm1585 = vweird.f32 %v1579
        %vm1586 = vmor %vm1584, %vm1585
        %v1587 = vsel %vm1586, %v1579, %v1583
        %v1588 = vand.u32 2147483647, %v1372
        %vm1589 = vcmp.eq.f32.partialorder %v1588, 8.507059e+37
        %v1590 = vand.u32 %v1372, 2147483648
        %v1591 = vor.u32 1.1754944e-38, %v1590
        %v1592 = vsel %vm1589, %v1591, %v1587
        %v1593 = vmul.f32 %v1547, %v1592
        %v1594 = vmul.f32 %v1548, %v1592
        %v1595 = vmul.f32 %v1549, %v1592
        %v1596 = vmul.f32 %v1550, %v1592
        %v1597 = vmul.f32 %v1551, %v1592
        %v1598 = vmul.f32 %v1552, %v1592
        %v1599 = vmul.f32 %v1553, %v1592
        %v1600 = vmul.f32 %v1554, %v1592
        %v1601 = vmul.f32 %v1555, %v1592
        %v1602 = vmul.f32 %v1556, %v1592
        %v1603 = vmul.f32 %v1557, %v1592
        %v1604 = vmul.f32 %v1558, %v1592
        %v1605 = vmul.f32 %v1559, %v1592
        %v1606 = vmul.f32 %v1560, %v1592
        %v1607 = vmul.f32 %v1561, %v1592
        %v1608 = vmul.f32 %v1562, %v1592
        %v1609 = vmul.f32 %v1563, %v1592
        %v1610 = vmul.f32 %v1564, %v1592
        %v1611 = vmul.f32 %v1565, %v1592
        %v1612 = vmul.f32 %v1566, %v1592
        %v1613 = vmul.f32 %v1567, %v1592
        %v1614 = vmul.f32 %v1568, %v1592
        %v1615 = vmul.f32 %v1569, %v1592
        %v1616 = vmul.f32 %v1570, %v1592
        %v1617 = vmul.f32 %v1571, %v1592
        %v1618 = vmul.f32 %v1572, %v1592
        %v1619 = vmul.f32 %v1573, %v1592
        %v1620 = vmul.f32 %v1574, %v1592
        %v1621 = vmul.f32 %v1575, %v1592
        %v1622 = vmul.f32 %v1576, %v1592
        %v1623 = vmul.f32 %v1577, %v1592
        %v1624 = vmul.f32 %v1578, %v1592
        %v1625 = vfloor.f32 %v1593
        %v1626 = vfloor.f32 %v1594
        %v1627 = vfloor.f32 %v1595
        %v1628 = vfloor.f32 %v1596
        %v1629 = vfloor.f32 %v1597
        %v1630 = vfloor.f32 %v1598
        %v1631 = vfloor.f32 %v1599
        %v1632 = vfloor.f32 %v1600
        %v1633 = vfloor.f32 %v1601
        %v1634 = vfloor.f32 %v1602
        %v1635 = vfloor.f32 %v1603
        %v1636 = vfloor.f32 %v1604
        %v1637 = vfloor.f32 %v1605
        %v1638 = vfloor.f32 %v1606
        %v1639 = vfloor.f32 %v1607
        %v1640 = vfloor.f32 %v1608
        %v1641 = vfloor.f32 %v1609
        %v1642 = vfloor.f32 %v1610
        %v1643 = vfloor.f32 %v1611
        %v1644 = vfloor.f32 %v1612
        %v1645 = vfloor.f32 %v1613
        %v1646 = vfloor.f32 %v1614
        %v1647 = vfloor.f32 %v1615
        %v1648 = vfloor.f32 %v1616
        %v1649 = vfloor.f32 %v1617
        %v1650 = vfloor.f32 %v1618
        %v1651 = vfloor.f32 %v1619
        %v1652 = vfloor.f32 %v1620
        %v1653 = vfloor.f32 %v1621
        %v1654 = vfloor.f32 %v1622
        %v1655 = vfloor.f32 %v1623
        %v1656 = vfloor.f32 %v1624
        %v1657 = vmul.f32 %v1625, %v1372
        %v1658 = vmul.f32 %v1626, %v1372
        %v1659 = vmul.f32 %v1627, %v1372
        %v1660 = vmul.f32 %v1628, %v1372
        %v1661 = vmul.f32 %v1629, %v1372
        %v1662 = vmul.f32 %v1630, %v1372
        %v1663 = vmul.f32 %v1631, %v1372
        %v1664 = vmul.f32 %v1632, %v1372
        %v1665 = vmul.f32 %v1633, %v1372
        %v1666 = vmul.f32 %v1634, %v1372
        %v1667 = vmul.f32 %v1635, %v1372
        %v1668 = vmul.f32 %v1636, %v1372
        %v1669 = vmul.f32 %v1637, %v1372
        %v1670 = vmul.f32 %v1638, %v1372
        %v1671 = vmul.f32 %v1639, %v1372
        %v1672 = vmul.f32 %v1640, %v1372
        %v1673 = vmul.f32 %v1641, %v1372
        %v1674 = vmul.f32 %v1642, %v1372
        %v1675 = vmul.f32 %v1643, %v1372
        %v1676 = vmul.f32 %v1644, %v1372
        %v1677 = vmul.f32 %v1645, %v1372
        %v1678 = vmul.f32 %v1646, %v1372
        %v1679 = vmul.f32 %v1647, %v1372
        %v1680 = vmul.f32 %v1648, %v1372
        %v1681 = vmul.f32 %v1649, %v1372
        %v1682 = vmul.f32 %v1650, %v1372
        %v1683 = vmul.f32 %v1651, %v1372
        %v1684 = vmul.f32 %v1652, %v1372
        %v1685 = vmul.f32 %v1653, %v1372
        %v1686 = vmul.f32 %v1654, %v1372
        %v1687 = vmul.f32 %v1655, %v1372
        %v1688 = vmul.f32 %v1656, %v1372
        %v1689 = vsub.f32 %v1515, %v1657
        %v1690 = vsub.f32 %v1516, %v1658
        %v1691 = vsub.f32 %v1517, %v1659
        %v1692 = vsub.f32 %v1518, %v1660
        %v1693 = vsub.f32 %v1519, %v1661
        %v1694 = vsub.f32 %v1520, %v1662
        %v1695 = vsub.f32 %v1521, %v1663
        %v1696 = vsub.f32 %v1522, %v1664
        %v1697 = vsub.f32 %v1523, %v1665
        %v1698 = vsub.f32 %v1524, %v1666
        %v1699 = vsub.f32 %v1525, %v1667
        %v1700 = vsub.f32 %v1526, %v1668
        %v1701 = vsub.f32 %v1527, %v1669
        %v1702 = vsub.f32 %v1528, %v1670
        %v1703 = vsub.f32 %v1529, %v1671
        %v1704 = vsub.f32 %v1530, %v1672
        %v1705 = vsub.f32 %v1531, %v1673
        %v1706 = vsub.f32 %v1532, %v1674
        %v1707 = vsub.f32 %v1533, %v1675
        %v1708 = vsub.f32 %v1534, %v1676
        %v1709 = vsub.f32 %v1535, %v1677
        %v1710 = vsub.f32 %v1536, %v1678
        %v1711 = vsub.f32 %v1537, %v1679
        %v1712 = vsub.f32 %v1538, %v1680
        %v1713 = vsub.f32 %v1539, %v1681
        %v1714 = vsub.f32 %v1540, %v1682
        %v1715 = vsub.f32 %v1541, %v1683
        %v1716 = vsub.f32 %v1542, %v1684
        %v1717 = vsub.f32 %v1543, %v1685
        %v1718 = vsub.f32 %v1544, %v1686
        %v1719 = vsub.f32 %v1545, %v1687
        %v1720 = vsub.f32 %v1546, %v1688
        %v1721 = vsub.f32 %v1689, 0.5
        %v1722 = vsub.f32 %v1690, 0.5
        %v1723 = vsub.f32 %v1691, 0.5
        %v1724 = vsub.f32 %v1692, 0.5
        %v1725 = vsub.f32 %v1693, 0.5
        %v1726 = vsub.f32 %v1694, 0.5
        %v1727 = vsub.f32 %v1695, 0.5
        %v1728 = vsub.f32 %v1696, 0.5
        %v1729 = vsub.f32 %v1697, 0.5
        %v1730 = vsub.f32 %v1698, 0.5
        %v1731 = vsub.f32 %v1699, 0.5
        %v1732 = vsub.f32 %v1700, 0.5
        %v1733 = vsub.f32 %v1701, 0.5
        %v1734 = vsub.f32 %v1702, 0.5
        %v1735 = vsub.f32 %v1703, 0.5
        %v1736 = vsub.f32 %v1704, 0.5
        %v1737 = vsub.f32 %v1705, 0.5
        %v1738 = vsub.f32 %v1706, 0.5
        %v1739 = vsub.f32 %v1707, 0.5
        %v1740 = vsub.f32 %v1708, 0.5
        %v1741 = vsub.f32 %v1709, 0.5
        %v1742 = vsub.f32 %v1710, 0.5
        %v1743 = vsub.f32 %v1711, 0.5
        %v1744 = vsub.f32 %v1712, 0.5
        %v1745 = vsub.f32 %v1713, 0.5
        %v1746 = vsub.f32 %v1714, 0.5
        %v1747 = vsub.f32 %v1715, 0.5
        %v1748 = vsub.f32 %v1716, 0.5
        %v1749 = vsub.f32 %v1717, 0.5
        %v1750 = vsub.f32 %v1718, 0.5
        %v1751 = vsub.f32 %v1719, 0.5
        %v1752 = vsub.f32 %v1720, 0.5
        %v1753 = vperm.slane %v345, 1
        %v1754 = vmul.f32 %v1721, %v1753
        %v1755 = vmul.f32 %v1722, %v1753
        %v1756 = vmul.f32 %v1723, %v1753
        %v1757 = vmul.f32 %v1724, %v1753
        %v1758 = vmul.f32 %v1725, %v1753
        %v1759 = vmul.f32 %v1726, %v1753
        %v1760 = vmul.f32 %v1727, %v1753
        %v1761 = vmul.f32 %v1728, %v1753
        %v1762 = vmul.f32 %v1729, %v1753
        %v1763 = vmul.f32 %v1730, %v1753
        %v1764 = vmul.f32 %v1731, %v1753
        %v1765 = vmul.f32 %v1732, %v1753
        %v1766 = vmul.f32 %v1733, %v1753
        %v1767 = vmul.f32 %v1734, %v1753
        %v1768 = vmul.f32 %v1735, %v1753
        %v1769 = vmul.f32 %v1736, %v1753
        %v1770 = vmul.f32 %v1737, %v1753
        %v1771 = vmul.f32 %v1738, %v1753
        %v1772 = vmul.f32 %v1739, %v1753
        %v1773 = vmul.f32 %v1740, %v1753
        %v1774 = vmul.f32 %v1741, %v1753
        %v1775 = vmul.f32 %v1742, %v1753
        %v1776 = vmul.f32 %v1743, %v1753
        %v1777 = vmul.f32 %v1744, %v1753
        %v1778 = vmul.f32 %v1745, %v1753
        %v1779 = vmul.f32 %v1746, %v1753
        %v1780 = vmul.f32 %v1747, %v1753
        %v1781 = vmul.f32 %v1748, %v1753
        %v1782 = vmul.f32 %v1749, %v1753
        %v1783 = vmul.f32 %v1750, %v1753
        %v1784 = vmul.f32 %v1751, %v1753
        %v1785 = vmul.f32 %v1752, %v1753
        %v1786 = vsub.f32 %v1625, 0.5
        %v1787 = vsub.f32 %v1626, 0.5
        %v1788 = vsub.f32 %v1627, 0.5
        %v1789 = vsub.f32 %v1628, 0.5
        %v1790 = vsub.f32 %v1629, 0.5
        %v1791 = vsub.f32 %v1630, 0.5
        %v1792 = vsub.f32 %v1631, 0.5
        %v1793 = vsub.f32 %v1632, 0.5
        %v1794 = vsub.f32 %v1633, 0.5
        %v1795 = vsub.f32 %v1634, 0.5
        %v1796 = vsub.f32 %v1635, 0.5
        %v1797 = vsub.f32 %v1636, 0.5
        %v1798 = vsub.f32 %v1637, 0.5
        %v1799 = vsub.f32 %v1638, 0.5
        %v1800 = vsub.f32 %v1639, 0.5
        %v1801 = vsub.f32 %v1640, 0.5
        %v1802 = vsub.f32 %v1641, 0.5
        %v1803 = vsub.f32 %v1642, 0.5
        %v1804 = vsub.f32 %v1643, 0.5
        %v1805 = vsub.f32 %v1644, 0.5
        %v1806 = vsub.f32 %v1645, 0.5
        %v1807 = vsub.f32 %v1646, 0.5
        %v1808 = vsub.f32 %v1647, 0.5
        %v1809 = vsub.f32 %v1648, 0.5
        %v1810 = vsub.f32 %v1649, 0.5
        %v1811 = vsub.f32 %v1650, 0.5
        %v1812 = vsub.f32 %v1651, 0.5
        %v1813 = vsub.f32 %v1652, 0.5
        %v1814 = vsub.f32 %v1653, 0.5
        %v1815 = vsub.f32 %v1654, 0.5
        %v1816 = vsub.f32 %v1655, 0.5
        %v1817 = vsub.f32 %v1656, 0.5
        %v1818 = vperm.slane %v345, 2
        %v1819 = vmul.f32 %v1786, %v1818
        %v1820 = vmul.f32 %v1787, %v1818
        %v1821 = vmul.f32 %v1788, %v1818
        %v1822 = vmul.f32 %v1789, %v1818
        %v1823 = vmul.f32 %v1790, %v1818
        %v1824 = vmul.f32 %v1791, %v1818
        %v1825 = vmul.f32 %v1792, %v1818
        %v1826 = vmul.f32 %v1793, %v1818
        %v1827 = vmul.f32 %v1794, %v1818
        %v1828 = vmul.f32 %v1795, %v1818
        %v1829 = vmul.f32 %v1796, %v1818
        %v1830 = vmul.f32 %v1797, %v1818
        %v1831 = vmul.f32 %v1798, %v1818
        %v1832 = vmul.f32 %v1799, %v1818
        %v1833 = vmul.f32 %v1800, %v1818
        %v1834 = vmul.f32 %v1801, %v1818
        %v1835 = vmul.f32 %v1802, %v1818
        %v1836 = vmul.f32 %v1803, %v1818
        %v1837 = vmul.f32 %v1804, %v1818
        %v1838 = vmul.f32 %v1805, %v1818
        %v1839 = vmul.f32 %v1806, %v1818
        %v1840 = vmul.f32 %v1807, %v1818
        %v1841 = vmul.f32 %v1808, %v1818
        %v1842 = vmul.f32 %v1809, %v1818
        %v1843 = vmul.f32 %v1810, %v1818
        %v1844 = vmul.f32 %v1811, %v1818
        %v1845 = vmul.f32 %v1812, %v1818
        %v1846 = vmul.f32 %v1813, %v1818
        %v1847 = vmul.f32 %v1814, %v1818
        %v1848 = vmul.f32 %v1815, %v1818
        %v1849 = vmul.f32 %v1816, %v1818
        %v1850 = vmul.f32 %v1817, %v1818
        %v1851 = vadd.f32 %v1754, %v1819
        %v1852 = vadd.f32 %v1755, %v1820
        %v1853 = vadd.f32 %v1756, %v1821
        %v1854 = vadd.f32 %v1757, %v1822
        %v1855 = vadd.f32 %v1758, %v1823
        %v1856 = vadd.f32 %v1759, %v1824
        %v1857 = vadd.f32 %v1760, %v1825
        %v1858 = vadd.f32 %v1761, %v1826
        %v1859 = vadd.f32 %v1762, %v1827
        %v1860 = vadd.f32 %v1763, %v1828
        %v1861 = vadd.f32 %v1764, %v1829
        %v1862 = vadd.f32 %v1765, %v1830
        %v1863 = vadd.f32 %v1766, %v1831
        %v1864 = vadd.f32 %v1767, %v1832
        %v1865 = vadd.f32 %v1768, %v1833
        %v1866 = vadd.f32 %v1769, %v1834
        %v1867 = vadd.f32 %v1770, %v1835
        %v1868 = vadd.f32 %v1771, %v1836
        %v1869 = vadd.f32 %v1772, %v1837
        %v1870 = vadd.f32 %v1773, %v1838
        %v1871 = vadd.f32 %v1774, %v1839
        %v1872 = vadd.f32 %v1775, %v1840
        %v1873 = vadd.f32 %v1776, %v1841
        %v1874 = vadd.f32 %v1777, %v1842
        %v1875 = vadd.f32 %v1778, %v1843
        %v1876 = vadd.f32 %v1779, %v1844
        %v1877 = vadd.f32 %v1780, %v1845
        %v1878 = vadd.f32 %v1781, %v1846
        %v1879 = vadd.f32 %v1782, %v1847
        %v1880 = vadd.f32 %v1783, %v1848
        %v1881 = vadd.f32 %v1784, %v1849
        %v1882 = vadd.f32 %v1785, %v1850
        %v1883 = vmul.f32 %v802, 2.0
        %v1884 = vmul.f32 %v817, 2.0
        %v1885 = vmul.f32 %v832, 2.0
        %v1886 = vmul.f32 %v847, 2.0
        %v1887 = vmul.f32 %v862, 2.0
        %v1888 = vmul.f32 %v877, 2.0
        %v1889 = vmul.f32 %v892, 2.0
        %v1890 = vmul.f32 %v907, 2.0
        %v1891 = vmul.f32 %v922, 2.0
        %v1892 = vmul.f32 %v937, 2.0
        %v1893 = vmul.f32 %v952, 2.0
        %v1894 = vmul.f32 %v967, 2.0
        %v1895 = vmul.f32 %v982, 2.0
        %v1896 = vmul.f32 %v997, 2.0
        %v1897 = vmul.f32 %v1012, 2.0
        %v1898 = vmul.f32 %v1027, 2.0
        %v1899 = vmul.f32 %v1042, 2.0
        %v1900 = vmul.f32 %v1057, 2.0
        %v1901 = vmul.f32 %v1072, 2.0
        %v1902 = vmul.f32 %v1087, 2.0
        %v1903 = vmul.f32 %v1102, 2.0
        %v1904 = vmul.f32 %v1117, 2.0
        %v1905 = vmul.f32 %v1132, 2.0
        %v1906 = vmul.f32 %v1147, 2.0
        %v1907 = vmul.f32 %v1162, 2.0
        %v1908 = vmul.f32 %v1177, 2.0
        %v1909 = vmul.f32 %v1192, 2.0
        %v1910 = vmul.f32 %v1207, 2.0
        %v1911 = vmul.f32 %v1222, 2.0
        %v1912 = vmul.f32 %v1237, 2.0
        %v1913 = vmul.f32 %v1252, 2.0
        %v1914 = vmul.f32 %v1267, 2.0
        %v1915 = vperm.slane %v345, 3
        %v1916 = vmul.f32 %v802, %v1915
        %v1917 = vmul.f32 %v817, %v1915
        %v1918 = vmul.f32 %v832, %v1915
        %v1919 = vmul.f32 %v847, %v1915
        %v1920 = vmul.f32 %v862, %v1915
        %v1921 = vmul.f32 %v877, %v1915
        %v1922 = vmul.f32 %v892, %v1915
        %v1923 = vmul.f32 %v907, %v1915
        %v1924 = vmul.f32 %v922, %v1915
        %v1925 = vmul.f32 %v937, %v1915
        %v1926 = vmul.f32 %v952, %v1915
        %v1927 = vmul.f32 %v967, %v1915
        %v1928 = vmul.f32 %v982, %v1915
        %v1929 = vmul.f32 %v997, %v1915
        %v1930 = vmul.f32 %v1012, %v1915
        %v1931 = vmul.f32 %v1027, %v1915
        %v1932 = vmul.f32 %v1042, %v1915
        %v1933 = vmul.f32 %v1057, %v1915
        %v1934 = vmul.f32 %v1072, %v1915
        %v1935 = vmul.f32 %v1087, %v1915
        %v1936 = vmul.f32 %v1102, %v1915
        %v1937 = vmul.f32 %v1117, %v1915
        %v1938 = vmul.f32 %v1132, %v1915
        %v1939 = vmul.f32 %v1147, %v1915
        %v1940 = vmul.f32 %v1162, %v1915
        %v1941 = vmul.f32 %v1177, %v1915
        %v1942 = vmul.f32 %v1192, %v1915
        %v1943 = vmul.f32 %v1207, %v1915
        %v1944 = vmul.f32 %v1222, %v1915
        %v1945 = vmul.f32 %v1237, %v1915
        %v1946 = vmul.f32 %v1252, %v1915
        %v1947 = vmul.f32 %v1267, %v1915
        %v1948 = vadd.f32 %v1883, %v1851
        %v1949 = vadd.f32 %v1884, %v1852
        %v1950 = vadd.f32 %v1885, %v1853
        %v1951 = vadd.f32 %v1886, %v1854
        %v1952 = vadd.f32 %v1887, %v1855
        %v1953 = vadd.f32 %v1888, %v1856
        %v1954 = vadd.f32 %v1889, %v1857
        %v1955 = vadd.f32 %v1890, %v1858
        %v1956 = vadd.f32 %v1891, %v1859
        %v1957 = vadd.f32 %v1892, %v1860
        %v1958 = vadd.f32 %v1893, %v1861
        %v1959 = vadd.f32 %v1894, %v1862
        %v1960 = vadd.f32 %v1895, %v1863
        %v1961 = vadd.f32 %v1896, %v1864
        %v1962 = vadd.f32 %v1897, %v1865
        %v1963 = vadd.f32 %v1898, %v1866
        %v1964 = vadd.f32 %v1899, %v1867
        %v1965 = vadd.f32 %v1900, %v1868
        %v1966 = vadd.f32 %v1901, %v1869
        %v1967 = vadd.f32 %v1902, %v1870
        %v1968 = vadd.f32 %v1903, %v1871
        %v1969 = vadd.f32 %v1904, %v1872
        %v1970 = vadd.f32 %v1905, %v1873
        %v1971 = vadd.f32 %v1906, %v1874
        %v1972 = vadd.f32 %v1907, %v1875
        %v1973 = vadd.f32 %v1908, %v1876
        %v1974 = vadd.f32 %v1909, %v1877
        %v1975 = vadd.f32 %v1910, %v1878
        %v1976 = vadd.f32 %v1911, %v1879
        %v1977 = vadd.f32 %v1912, %v1880
        %v1978 = vadd.f32 %v1913, %v1881
        %v1979 = vadd.f32 %v1914, %v1882
        %v1980 = vperm.slane %v345, 4
        %v1981 = vmul.f32 %v1948, %v1980
        %v1982 = vmul.f32 %v1949, %v1980
        %v1983 = vmul.f32 %v1950, %v1980
        %v1984 = vmul.f32 %v1951, %v1980
        %v1985 = vmul.f32 %v1952, %v1980
        %v1986 = vmul.f32 %v1953, %v1980
        %v1987 = vmul.f32 %v1954, %v1980
        %v1988 = vmul.f32 %v1955, %v1980
        %v1989 = vmul.f32 %v1956, %v1980
        %v1990 = vmul.f32 %v1957, %v1980
        %v1991 = vmul.f32 %v1958, %v1980
        %v1992 = vmul.f32 %v1959, %v1980
        %v1993 = vmul.f32 %v1960, %v1980
        %v1994 = vmul.f32 %v1961, %v1980
        %v1995 = vmul.f32 %v1962, %v1980
        %v1996 = vmul.f32 %v1963, %v1980
        %v1997 = vmul.f32 %v1964, %v1980
        %v1998 = vmul.f32 %v1965, %v1980
        %v1999 = vmul.f32 %v1966, %v1980
        %v2000 = vmul.f32 %v1967, %v1980
        %v2001 = vmul.f32 %v1968, %v1980
        %v2002 = vmul.f32 %v1969, %v1980
        %v2003 = vmul.f32 %v1970, %v1980
        %v2004 = vmul.f32 %v1971, %v1980
        %v2005 = vmul.f32 %v1972, %v1980
        %v2006 = vmul.f32 %v1973, %v1980
        %v2007 = vmul.f32 %v1974, %v1980
        %v2008 = vmul.f32 %v1975, %v1980
        %v2009 = vmul.f32 %v1976, %v1980
        %v2010 = vmul.f32 %v1977, %v1980
        %v2011 = vmul.f32 %v1978, %v1980
        %v2012 = vmul.f32 %v1979, %v1980
        %v2013 = vadd.f32 %v1916, %v1981
        %v2014 = vadd.f32 %v1917, %v1982
        %v2015 = vadd.f32 %v1918, %v1983
        %v2016 = vadd.f32 %v1919, %v1984
        %v2017 = vadd.f32 %v1920, %v1985
        %v2018 = vadd.f32 %v1921, %v1986
        %v2019 = vadd.f32 %v1922, %v1987
        %v2020 = vadd.f32 %v1923, %v1988
        %v2021 = vadd.f32 %v1924, %v1989
        %v2022 = vadd.f32 %v1925, %v1990
        %v2023 = vadd.f32 %v1926, %v1991
        %v2024 = vadd.f32 %v1927, %v1992
        %v2025 = vadd.f32 %v1928, %v1993
        %v2026 = vadd.f32 %v1929, %v1994
        %v2027 = vadd.f32 %v1930, %v1995
        %v2028 = vadd.f32 %v1931, %v1996
        %v2029 = vadd.f32 %v1932, %v1997
        %v2030 = vadd.f32 %v1933, %v1998
        %v2031 = vadd.f32 %v1934, %v1999
        %v2032 = vadd.f32 %v1935, %v2000
        %v2033 = vadd.f32 %v1936, %v2001
        %v2034 = vadd.f32 %v1937, %v2002
        %v2035 = vadd.f32 %v1938, %v2003
        %v2036 = vadd.f32 %v1939, %v2004
        %v2037 = vadd.f32 %v1940, %v2005
        %v2038 = vadd.f32 %v1941, %v2006
        %v2039 = vadd.f32 %v1942, %v2007
        %v2040 = vadd.f32 %v1943, %v2008
        %v2041 = vadd.f32 %v1944, %v2009
        %v2042 = vadd.f32 %v1945, %v2010
        %v2043 = vadd.f32 %v1946, %v2011
        %v2044 = vadd.f32 %v1947, %v2012
        %v2045 = vmul.f32 %v1883, %v1883
        %v2046 = vmul.f32 %v1884, %v1884
        %v2047 = vmul.f32 %v1885, %v1885
        %v2048 = vmul.f32 %v1886, %v1886
        %v2049 = vmul.f32 %v1887, %v1887
        %v2050 = vmul.f32 %v1888, %v1888
        %v2051 = vmul.f32 %v1889, %v1889
        %v2052 = vmul.f32 %v1890, %v1890
        %v2053 = vmul.f32 %v1891, %v1891
        %v2054 = vmul.f32 %v1892, %v1892
        %v2055 = vmul.f32 %v1893, %v1893
        %v2056 = vmul.f32 %v1894, %v1894
        %v2057 = vmul.f32 %v1895, %v1895
        %v2058 = vmul.f32 %v1896, %v1896
        %v2059 = vmul.f32 %v1897, %v1897
        %v2060 = vmul.f32 %v1898, %v1898
        %v2061 = vmul.f32 %v1899, %v1899
        %v2062 = vmul.f32 %v1900, %v1900
        %v2063 = vmul.f32 %v1901, %v1901
        %v2064 = vmul.f32 %v1902, %v1902
        %v2065 = vmul.f32 %v1903, %v1903
        %v2066 = vmul.f32 %v1904, %v1904
        %v2067 = vmul.f32 %v1905, %v1905
        %v2068 = vmul.f32 %v1906, %v1906
        %v2069 = vmul.f32 %v1907, %v1907
        %v2070 = vmul.f32 %v1908, %v1908
        %v2071 = vmul.f32 %v1909, %v1909
        %v2072 = vmul.f32 %v1910, %v1910
        %v2073 = vmul.f32 %v1911, %v1911
        %v2074 = vmul.f32 %v1912, %v1912
        %v2075 = vmul.f32 %v1913, %v1913
        %v2076 = vmul.f32 %v1914, %v1914
        %v2077 = vperm.slane %v345, 5
        %v2078 = vmul.f32 %v2045, %v2077
        %v2079 = vmul.f32 %v2046, %v2077
        %v2080 = vmul.f32 %v2047, %v2077
        %v2081 = vmul.f32 %v2048, %v2077
        %v2082 = vmul.f32 %v2049, %v2077
        %v2083 = vmul.f32 %v2050, %v2077
        %v2084 = vmul.f32 %v2051, %v2077
        %v2085 = vmul.f32 %v2052, %v2077
        %v2086 = vmul.f32 %v2053, %v2077
        %v2087 = vmul.f32 %v2054, %v2077
        %v2088 = vmul.f32 %v2055, %v2077
        %v2089 = vmul.f32 %v2056, %v2077
        %v2090 = vmul.f32 %v2057, %v2077
        %v2091 = vmul.f32 %v2058, %v2077
        %v2092 = vmul.f32 %v2059, %v2077
        %v2093 = vmul.f32 %v2060, %v2077
        %v2094 = vmul.f32 %v2061, %v2077
        %v2095 = vmul.f32 %v2062, %v2077
        %v2096 = vmul.f32 %v2063, %v2077
        %v2097 = vmul.f32 %v2064, %v2077
        %v2098 = vmul.f32 %v2065, %v2077
        %v2099 = vmul.f32 %v2066, %v2077
        %v2100 = vmul.f32 %v2067, %v2077
        %v2101 = vmul.f32 %v2068, %v2077
        %v2102 = vmul.f32 %v2069, %v2077
        %v2103 = vmul.f32 %v2070, %v2077
        %v2104 = vmul.f32 %v2071, %v2077
        %v2105 = vmul.f32 %v2072, %v2077
        %v2106 = vmul.f32 %v2073, %v2077
        %v2107 = vmul.f32 %v2074, %v2077
        %v2108 = vmul.f32 %v2075, %v2077
        %v2109 = vmul.f32 %v2076, %v2077
        %v2110 = vadd.f32 %v2013, %v2078
        %v2111 = vadd.f32 %v2014, %v2079
        %v2112 = vadd.f32 %v2015, %v2080
        %v2113 = vadd.f32 %v2016, %v2081
        %v2114 = vadd.f32 %v2017, %v2082
        %v2115 = vadd.f32 %v2018, %v2083
        %v2116 = vadd.f32 %v2019, %v2084
        %v2117 = vadd.f32 %v2020, %v2085
        %v2118 = vadd.f32 %v2021, %v2086
        %v2119 = vadd.f32 %v2022, %v2087
        %v2120 = vadd.f32 %v2023, %v2088
        %v2121 = vadd.f32 %v2024, %v2089
        %v2122 = vadd.f32 %v2025, %v2090
        %v2123 = vadd.f32 %v2026, %v2091
        %v2124 = vadd.f32 %v2027, %v2092
        %v2125 = vadd.f32 %v2028, %v2093
        %v2126 = vadd.f32 %v2029, %v2094
        %v2127 = vadd.f32 %v2030, %v2095
        %v2128 = vadd.f32 %v2031, %v2096
        %v2129 = vadd.f32 %v2032, %v2097
        %v2130 = vadd.f32 %v2033, %v2098
        %v2131 = vadd.f32 %v2034, %v2099
        %v2132 = vadd.f32 %v2035, %v2100
        %v2133 = vadd.f32 %v2036, %v2101
        %v2134 = vadd.f32 %v2037, %v2102
        %v2135 = vadd.f32 %v2038, %v2103
        %v2136 = vadd.f32 %v2039, %v2104
        %v2137 = vadd.f32 %v2040, %v2105
        %v2138 = vadd.f32 %v2041, %v2106
        %v2139 = vadd.f32 %v2042, %v2107
        %v2140 = vadd.f32 %v2043, %v2108
        %v2141 = vadd.f32 %v2044, %v2109
        %2142 = vst [vmem:[%s339] sm:$0xff] %v2110
        %2143 = vst [vmem:[%s339 + $0x8] sm:$0xff] %v2111
        %2144 = vst [vmem:[%s339 + $0x10] sm:$0xff] %v2112
        %2145 = vst [vmem:[%s339 + $0x18] sm:$0xff] %v2113
        %2146 = vst [vmem:[%s339 + $0x20] sm:$0xff] %v2114
        %2147 = vst [vmem:[%s339 + $0x28] sm:$0xff] %v2115
        %2148 = vst [vmem:[%s339 + $0x30] sm:$0xff] %v2116
        %2149 = vst [vmem:[%s339 + $0x38] sm:$0xff] %v2117
        %2150 = vst [vmem:[%s339 + $0x40] sm:$0xff] %v2118
        %2151 = vst [vmem:[%s339 + $0x48] sm:$0xff] %v2119
        %2152 = vst [vmem:[%s339 + $0x50] sm:$0xff] %v2120
        %2153 = vst [vmem:[%s339 + $0x58] sm:$0xff] %v2121
        %2154 = vst [vmem:[%s339 + $0x60] sm:$0xff] %v2122
        %2155 = vst [vmem:[%s339 + $0x68] sm:$0xff] %v2123
        %2156 = vst [vmem:[%s339 + $0x70] sm:$0xff] %v2124
        %2157 = vst [vmem:[%s339 + $0x78] sm:$0xff] %v2125
        %2158 = vst [vmem:[%s339 + $0x80] sm:$0xff] %v2126
        %2159 = vst [vmem:[%s339 + $0x88] sm:$0xff] %v2127
        %2160 = vst [vmem:[%s339 + $0x90] sm:$0xff] %v2128
        %2161 = vst [vmem:[%s339 + $0x98] sm:$0xff] %v2129
        %2162 = vst [vmem:[%s339 + $0xa0] sm:$0xff] %v2130
        %2163 = vst [vmem:[%s339 + $0xa8] sm:$0xff] %v2131
        %2164 = vst [vmem:[%s339 + $0xb0] sm:$0xff] %v2132
        %2165 = vst [vmem:[%s339 + $0xb8] sm:$0xff] %v2133
        %2166 = vst [vmem:[%s339 + $0xc0] sm:$0xff] %v2134
        %2167 = vst [vmem:[%s339 + $0xc8] sm:$0xff] %v2135
        %2168 = vst [vmem:[%s339 + $0xd0] sm:$0xff] %v2136
        %2169 = vst [vmem:[%s339 + $0xd8] sm:$0xff] %v2137
        %2170 = vst [vmem:[%s339 + $0xe0] sm:$0xff] %v2138
        %2171 = vst [vmem:[%s339 + $0xe8] sm:$0xff] %v2139
        %2172 = vst [vmem:[%s339 + $0xf0] sm:$0xff] %v2140
        %2173 = vst [vmem:[%s339 + $0xf8] sm:$0xff] %v2141
        %s2174 = sand.u32 %s145, 1
        %s2175 = scalar_lea.sflag [#allocation9], %s2174
        %s2176 = sand.u32 %s145, 1
        %s2177 = smul.addr %s2176, 256
        %s2178 = scalar_lea.vmem [#allocation13], %s2177
        %s2179 = sand.u32 %s171, 1
        %s2180 = scalar_lea.sflag [#allocation15], %s2179
        %s2181 = sand.u32 %s171, 1
        %s2182 = smul.addr %s2181, 256
        %s2183 = scalar_lea.vmem [#allocation14], %s2182
        // Predicated region
        $region45: #{tpu_custom_call.1} parent=31 // pred_check
          %p2184 = pneg %p155
        $region46: #{tpu_custom_call.1} parent=31 // pred_check_branch
          %2186 = sbr.rel (%p2184) target = $region48
        $region47: #{tpu_custom_call.1} parent=31 // pred_region
          %s2187 = smul.u32 32, %s55
          %2189 = vsyncadd %s2175, 0
          %s2190 = smul.addr %s2187, 8
          %s2191 = scalar_lea.hbm %s7, %s2190
          %s2192 = sshll.u32 %s2178, 4
          %s2193 = int_to_ptr.vmem [resolvable:$true] %s2192
          %s2194 = sshll.u32 %s2191, 4
          %s2195 = int_to_ptr.hbm [resolvable:$true] %s2194
          %2200 = dma.vmem_to_hbm [thread:$0]  %s2193, 4096, %s2195, %s2175, 128, 128, 8
        $region48: #{tpu_custom_call.1} parent=31 // pred_fallthru
          _
        // Predicated region
        $region49: #{tpu_custom_call.1} parent=31 // pred_check
          %p2201 = pneg %p181
        $region50: #{tpu_custom_call.1} parent=31 // pred_check_branch
          %2203 = sbr.rel (%p2201) target = $region52
        $region51: #{tpu_custom_call.1} parent=31 // pred_region
          %s2204 = smul.u32 32, %s55
          %2206 = vsyncadd %s2180, 0
          %s2207 = smul.addr %s2204, 8
          %s2208 = scalar_lea.hbm %s8, %s2207
          %s2209 = sshll.u32 %s2183, 4
          %s2210 = int_to_ptr.vmem [resolvable:$true] %s2209
          %s2211 = sshll.u32 %s2208, 4
          %s2212 = int_to_ptr.hbm [resolvable:$true] %s2211
          %2217 = dma.vmem_to_hbm [thread:$0]  %s2210, 4096, %s2212, %s2180, 128, 128, 8
        $region52: #{tpu_custom_call.1} parent=31 // pred_fallthru
          _
      $region32: #{tpu_custom_call.1} parent=5 // pred_fallthru
        _
      %p2218 = scmp.le.s32.totalorder 2, %s50
      // Predicated region
      $region53: #{tpu_custom_call.1} parent=5 // pred_check
        %p2219 = pneg %p2218
      $region54: #{tpu_custom_call.1} parent=5 // pred_check_branch
        %2221 = sbr.rel (%p2219) target = $region56
      $region55: #{tpu_custom_call.1} parent=5 // pred_region
        %s2222 = ssub.s32 %s50, 2
        // Predicated region
        $region57: #{tpu_custom_call.1} parent=55 // pred_check
          %p2223 = pneg %p161
        $region58: #{tpu_custom_call.1} parent=55 // pred_check_branch
          %2225 = sbr.rel (%p2223) target = $region60
        $region59: #{tpu_custom_call.1} parent=55 // pred_region
          %s2226 = sand.u32 %s146, 1
          %s2227 = scalar_lea.sflag [#allocation9], %s2226
          %s2228 = sand.u32 %s146, 1
          %s2229 = smul.addr %s2228, 256
          %s2230 = scalar_lea.vmem [#allocation13], %s2229
          %2232 = dma.done %s2227, 4096
        $region60: #{tpu_custom_call.1} parent=55 // pred_fallthru
          _
        // Predicated region
        $region61: #{tpu_custom_call.1} parent=55 // pred_check
          %p2233 = pneg %p187
        $region62: #{tpu_custom_call.1} parent=55 // pred_check_branch
          %2235 = sbr.rel (%p2233) target = $region64
        $region63: #{tpu_custom_call.1} parent=55 // pred_region
          %s2236 = sand.u32 %s172, 1
          %s2237 = scalar_lea.sflag [#allocation15], %s2236
          %s2238 = sand.u32 %s172, 1
          %s2239 = smul.addr %s2238, 256
          %s2240 = scalar_lea.vmem [#allocation14], %s2239
          %2242 = dma.done %s2237, 4096
        $region64: #{tpu_custom_call.1} parent=55 // pred_fallthru
          _
      $region56: #{tpu_custom_call.1} parent=5 // pred_fallthru
        _
    $region6: #{tpu_custom_call.1} parent=1 // loop_footer
      %s54 = sadd.s32 1, %s50
    $region7: #{tpu_custom_call.1} parent=1 // loop_footer_branch
      %49 = sbr.rel target = $region3
    $region8: #{tpu_custom_call.1} parent=1 // loop_exit
      _
    %2243 = vsyncpa [#allocation8], 1
    %s2244 = scalar_lea.sflag [#allocation8], 1
    %2245 = vsyncpa %s2244, 1
    %2246 = vsyncpa [#allocation11], 1
    %s2247 = scalar_lea.sflag [#allocation11], 1
    %2248 = vsyncpa %s2247, 1
    %2249 = vsyncpa [#allocation9], 1
    %s2250 = scalar_lea.sflag [#allocation9], 1
    %2251 = vsyncpa %s2250, 1
    %2252 = vsyncpa [#allocation15], 1
    %s2253 = scalar_lea.sflag [#allocation15], 1
    %2254 = vsyncpa %s2253, 1

</llo_original>
